<compile_context>
chip_gen: v7x
topology: tpu7x:2x2x1
jax: 0.10.0
libtpu: 0.0.40
codegen_flags: <defaults>
</compile_context>

<pallas_src>
import functools
import math

import numpy as np
import jax
import jax.numpy as jnp
from jax.experimental import pallas as pl
from jax.experimental.pallas import tpu as pltpu


# ---------------------------------------------------------------------------
# JPEG constants (identical values to DiffJPEG utils.py: y_table / c_table).
# ---------------------------------------------------------------------------
Y_TABLE = np.array(
    [[16, 11, 10, 16, 24, 40, 51, 61],
     [12, 12, 14, 19, 26, 58, 60, 55],
     [14, 13, 16, 24, 40, 57, 69, 56],
     [14, 17, 22, 29, 51, 87, 80, 62],
     [18, 22, 37, 56, 68, 109, 103, 77],
     [24, 35, 55, 64, 81, 104, 113, 92],
     [49, 64, 78, 87, 103, 121, 120, 101],
     [72, 92, 95, 98, 112, 100, 103, 99]], dtype=np.float32).T

C_TABLE = np.full((8, 8), 99.0, dtype=np.float32)
C_TABLE[:4, :4] = np.array(
    [[17, 18, 24, 47],
     [18, 21, 26, 66],
     [24, 26, 56, 99],
     [47, 66, 99, 99]], dtype=np.float32).T

# 1-D DCT basis C[x, u] = cos((2x+1) u pi / 16);  8x8 block DCT = C^T @ X @ C.
DCT_C = np.array(
    [[math.cos((2 * x + 1) * u * math.pi / 16) for u in range(8)] for x in range(8)],
    dtype=np.float32)
ALPHA = np.array([1.0 / math.sqrt(2.0)] + [1.0] * 7, dtype=np.float32)
DCT_SCALE = (np.outer(ALPHA, ALPHA) * 0.25).astype(np.float32)

# RGB->YCbCr coefficients with the *255 input scale folded in (Y also gets -128 in-kernel;
# the +128 chroma shift cancels exactly against the DCT stage's -128 through the pool).
_YCC = (np.array([[0.299, 0.587, 0.114],
                  [-0.168736, -0.331264, 0.5],
                  [0.5, -0.418688, -0.081312]], dtype=np.float64) * 255.0).astype(np.float32)


# ---------------------------------------------------------------------------
# Pallas kernel: one (bt, 3, Th, Tw) image tile -> lane-dense Y / Cb / Cr plane tiles.
# ---------------------------------------------------------------------------
def _jpeg_kernel(img_ref, mly_ref, mry_ref, mlc_ref, mrc_ref, qy_ref, qc_ref,
                 y_ref, cb_ref, cr_ref, *, bt):
    f32 = jnp.float32
    # Hoist the (small, tile-sized) constants once per grid step.
    mly = mly_ref[...]
    mry = mry_ref[...]
    mlc = mlc_ref[...]
    mrc = mrc_ref[...]
    qy = qy_ref[...]
    qc = qc_ref[...]

    def dct_quant(plane, ml, mr, q):
        t = jnp.dot(ml, plane, preferred_element_type=f32)
        d = jnp.dot(t, mr, preferred_element_type=f32)
        return jnp.round(d * q)

    for n in range(bt):  # static unroll; bt is small
        r = img_ref[n, 0].astype(f32)
        g = img_ref[n, 1].astype(f32)
        b = img_ref[n, 2].astype(f32)

        # rgb_to_ycbcr_jpeg with *255 and the Y -128 bias folded into the coefficients.
        y = _YCC[0, 0] * r + _YCC[0, 1] * g + _YCC[0, 2] * b - 128.0
        cb = _YCC[1, 0] * r + _YCC[1, 1] * g + _YCC[1, 2] * b
        cr = _YCC[2, 0] * r + _YCC[2, 1] * g + _YCC[2, 2] * b

        # Blockwise 8x8 DCT as two matmuls with tile-sized block-diagonal factors
        # (chroma factors fold the 2x2 average pool); quantization is one elementwise
        # multiply with a tile-sized pre-tiled map  scale[u,v] / (table[u,v] * factor).
        y_ref[n] = dct_quant(y, mly, mry, qy)       # (Th, Tw)
        cb_ref[n] = dct_quant(cb, mlc, mrc, qc)     # (Th//2, Tw//2)
        cr_ref[n] = dct_quant(cr, mlc, mrc, qc)     # (Th//2, Tw//2)


# ---------------------------------------------------------------------------
# Wrapper
# ---------------------------------------------------------------------------
def _pick_spatial_tile(dim, quantum, target=256):
    """Largest multiple of `quantum` <= target that divides dim; fall back to dim."""
    if dim <= target:
        return dim
    t = (target // quantum) * quantum
    while t >= quantum:
        if dim % t == 0:
            return t
        t -= quantum
    return dim


def _pick_batch_tile(B, T_h, T_w, H, W):
    """Group several small images per grid step (only when one tile covers the image)."""
    if T_h != H or T_w != W:
        return 1
    budget = 2 * 1024 * 1024                      # bytes of input block per step
    per_img = 3 * H * W * 4
    cap = max(1, budget // per_img)
    bt = 1
    for d in range(1, B + 1):
        if B % d == 0 and d <= cap:
            bt = d
    return bt


def _block_split(plane):
    """block_splitting: (B, h, w) -> (B, h*w/64, 8, 8) in raster block order."""
    B, h, w = plane.shape
    x = plane.reshape(B, h // 8, 8, w // 8, 8)
    x = jnp.transpose(x, (0, 1, 3, 2, 4))
    return x.reshape(B, -1, 8, 8)


def compress_jpeg(image, factor=1.0):
    """image: (B, 3, H, W) RGB in [0, 1].  Returns (y, cb, cr) like the PyTorch module:
    y: (B, H*W/64, 8, 8), cb/cr: (B, H*W/256, 8, 8), all float32 (rounded)."""
    B, C, H, W = image.shape
    assert C == 3 and H % 16 == 0 and W % 16 == 0, (B, C, H, W)

    # MXU-sized spatial tiles (sublane tile must be a multiple of 16; lane tile a multiple
    # of 256 so the chroma output lane width stays a multiple of 128, else full width).
    T_h = _pick_spatial_tile(H, 16, 256)
    T_w = _pick_spatial_tile(W, 256, 256)
    bt = _pick_batch_tile(B, T_h, T_w, H, W)
    grid = (B // bt, H // T_h, W // T_w)

    def blockdiag(m, n):
        return np.kron(np.eye(n, dtype=np.float32), m).astype(np.float32)

    # 2x2 average-pool operators along rows / columns (tile-sized).
    p_row = np.zeros((T_h // 2, T_h), np.float32)
    p_row[np.arange(T_h // 2), 2 * np.arange(T_h // 2)] = 0.5
    p_row[np.arange(T_h // 2), 2 * np.arange(T_h // 2) + 1] = 0.5
    p_col = np.zeros((T_w, T_w // 2), np.float32)
    p_col[2 * np.arange(T_w // 2), np.arange(T_w // 2)] = 0.5
    p_col[2 * np.arange(T_w // 2) + 1, np.arange(T_w // 2)] = 0.5

    m_left_y = blockdiag(DCT_C.T, T_h // 8)                       # (Th, Th)
    m_right_y = blockdiag(DCT_C, T_w // 8)                        # (Tw, Tw)
    m_left_c = blockdiag(DCT_C.T, T_h // 16) @ p_row              # (Th//2, Th)
    m_right_c = p_col @ blockdiag(DCT_C, T_w // 16)               # (Tw, Tw//2)

    qmap_y = np.tile(DCT_SCALE / (Y_TABLE * factor), (T_h // 8, T_w // 8)).astype(np.float32)
    qmap_c = np.tile(DCT_SCALE / (C_TABLE * factor), (T_h // 16, T_w // 16)).astype(np.float32)

    def const_spec(shape):
        n = len(shape)
        return pl.BlockSpec(shape, lambda b, i, j, _n=n: (0,) * _n)

    kernel = functools.partial(_jpeg_kernel, bt=bt)

    y_plane, cb_plane, cr_plane = pl.pallas_call(
        kernel,
        out_shape=(jax.ShapeDtypeStruct((B, H, W), jnp.float32),
                   jax.ShapeDtypeStruct((B, H // 2, W // 2), jnp.float32),
                   jax.ShapeDtypeStruct((B, H // 2, W // 2), jnp.float32)),
        grid=grid,
        in_specs=[
            pl.BlockSpec((bt, 3, T_h, T_w), lambda b, i, j: (b, 0, i, j)),
            const_spec((T_h, T_h)), const_spec((T_w, T_w)),
            const_spec((T_h // 2, T_h)), const_spec((T_w, T_w // 2)),
            const_spec((T_h, T_w)), const_spec((T_h // 2, T_w // 2)),
        ],
        out_specs=(
            pl.BlockSpec((bt, T_h, T_w), lambda b, i, j: (b, i, j)),
            pl.BlockSpec((bt, T_h // 2, T_w // 2), lambda b, i, j: (b, i, j)),
            pl.BlockSpec((bt, T_h // 2, T_w // 2), lambda b, i, j: (b, i, j)),
        ),
        compiler_params=pltpu.CompilerParams(
            dimension_semantics=("parallel", "parallel", "parallel")),
    )(image, jnp.asarray(m_left_y), jnp.asarray(m_right_y),
      jnp.asarray(m_left_c), jnp.asarray(m_right_c),
      jnp.asarray(qmap_y), jnp.asarray(qmap_c))

    # block_splitting (to (B, N, 8, 8)) as a single cheap wrapper-side layout pass.
    return _block_split(y_plane), _block_split(cb_plane), _block_split(cr_plane)


# ---------------------------------------------------------------------------
# Pure-JAX reference (op-for-op mirror of the PyTorch module)
# ---------------------------------------------------------------------------
def compress_jpeg_ref(image, factor=1.0):
    B, _, H, W = image.shape
    prec = jax.lax.Precision.HIGHEST
    img = image.astype(jnp.float32) * 255.0
    x = jnp.transpose(img, (0, 2, 3, 1))                              # (B, H, W, 3)
    matrix = jnp.asarray(np.array(
        [[0.299, 0.587, 0.114],
         [-0.168736, -0.331264, 0.5],
         [0.5, -0.418688, -0.081312]], dtype=np.float32).T)
    shift = jnp.array([0.0, 128.0, 128.0], jnp.float32)
    ycbcr = jnp.tensordot(x, matrix, axes=1, precision=prec) + shift

    y = ycbcr[..., 0]
    cb = ycbcr[..., 1].reshape(B, H // 2, 2, W // 2, 2).mean(axis=(2, 4))
    cr = ycbcr[..., 2].reshape(B, H // 2, 2, W // 2, 2).mean(axis=(2, 4))

    dct_tensor = jnp.asarray(np.einsum("xu,yv->xyuv", DCT_C, DCT_C).astype(np.float32))
    scale = jnp.asarray(DCT_SCALE)

    def comp(plane, table):
        b, h, w = plane.shape
        blocks = plane.reshape(b, h // 8, 8, w // 8, 8)
        blocks = blocks.transpose(0, 1, 3, 2, 4).reshape(b, -1, 8, 8)
        res = scale * jnp.tensordot(blocks - 128.0, dct_tensor, axes=2, precision=prec)
        return res / (jnp.asarray(table) * factor)

    pre = (comp(y, Y_TABLE), comp(cb, C_TABLE), comp(cr, C_TABLE))
    return tuple(jnp.round(p) for p in pre), pre


if __name__ == "__main__":
    key = jax.random.PRNGKey(0)
    B, H, W = 2, 3, 16
    B, H, W = 2, 16, 16
    image = jax.random.uniform(key, (B, 3, H, W), dtype=jnp.float32)   # RGB in [0, 1]

    y, cb, cr = jax.block_until_ready(compress_jpeg(image, factor=1.0))
    (y_r, cb_r, cr_r), (y_p, cb_p, cr_p) = compress_jpeg_ref(image, factor=1.0)

    assert y.shape == (B, H * W // 64, 8, 8) and y.dtype == jnp.float32, (y.shape, y.dtype)
    assert cb.shape == (B, H * W // 256, 8, 8) and cr.shape == cb.shape, (cb.shape, cr.shape)

    def check(out, ref_rounded, ref_pre, name):
        diff = jnp.abs(out - ref_rounded)
        # Rounding is discontinuous: allow an off-by-one only where the reference's
        # pre-rounding value sits within 2e-2 of a .5 tie (matmul-precision slack).
        frac = ref_pre - jnp.floor(ref_pre)
        near_tie = jnp.abs(frac - 0.5) < 2e-2
        ok = (diff <= 1e-3) | (near_tie & (diff <= 1.0))
        assert bool(jnp.all(ok)), f"{name}: max diff {float(jnp.max(diff))}"

    check(y, y_r, y_p, "y")
    check(cb, cb_r, cb_p, "cb")
    check(cr, cr_r, cr_p, "cr")

    print("KERNEL_OK")
</pallas_src>

<mosaic_0001>
module attributes {stable_mosaic.version = 11 : i64} {
  func.func @_jpeg_kernel(%arg0: i32, %arg1: i32, %arg2: i32, %arg3: memref<2x3x16x16xf32, #tpu.memory_space<vmem>>, %arg4: memref<16x16xf32, #tpu.memory_space<vmem>>, %arg5: memref<16x16xf32, #tpu.memory_space<vmem>>, %arg6: memref<8x16xf32, #tpu.memory_space<vmem>>, %arg7: memref<16x8xf32, #tpu.memory_space<vmem>>, %arg8: memref<16x16xf32, #tpu.memory_space<vmem>>, %arg9: memref<8x8xf32, #tpu.memory_space<vmem>>, %arg10: memref<2x16x16xf32, #tpu.memory_space<vmem>>, %arg11: memref<2x8x8xf32, #tpu.memory_space<vmem>>, %arg12: memref<2x8x8xf32, #tpu.memory_space<vmem>>) attributes {dimension_semantics = [#tpu.dimension_semantics<parallel>, #tpu.dimension_semantics<parallel>, #tpu.dimension_semantics<parallel>], iteration_bounds = array<i64: 1, 1, 1>, scalar_prefetch = 0 : i64, scratch_operands = 0 : i64, tpu.core_type = #tpu.core_type<tc>, window_params = [{transform_indices = @transform_0, window_bounds = array<i64: 2, 3, 16, 16>}, {pipeline_mode = #tpu.pipeline_mode<synchronous>, transform_indices = @transform_1, window_bounds = array<i64: 16, 16>}, {pipeline_mode = #tpu.pipeline_mode<synchronous>, transform_indices = @transform_2, window_bounds = array<i64: 16, 16>}, {pipeline_mode = #tpu.pipeline_mode<synchronous>, transform_indices = @transform_3, window_bounds = array<i64: 8, 16>}, {pipeline_mode = #tpu.pipeline_mode<synchronous>, transform_indices = @transform_4, window_bounds = array<i64: 16, 8>}, {pipeline_mode = #tpu.pipeline_mode<synchronous>, transform_indices = @transform_5, window_bounds = array<i64: 16, 16>}, {pipeline_mode = #tpu.pipeline_mode<synchronous>, transform_indices = @transform_6, window_bounds = array<i64: 8, 8>}, {transform_indices = @transform_7, window_bounds = array<i64: 2, 16, 16>}, {transform_indices = @transform_8, window_bounds = array<i64: 2, 8, 8>}, {transform_indices = @transform_9, window_bounds = array<i64: 2, 8, 8>}]} {
    %c0 = arith.constant 0 : index
    %c0_0 = arith.constant 0 : index
    %0 = vector.load %arg4[%c0, %c0_0] : memref<16x16xf32, #tpu.memory_space<vmem>>, vector<16x16xf32>
    %c0_1 = arith.constant 0 : index
    %c0_2 = arith.constant 0 : index
    %1 = vector.load %arg5[%c0_1, %c0_2] : memref<16x16xf32, #tpu.memory_space<vmem>>, vector<16x16xf32>
    %c0_3 = arith.constant 0 : index
    %c0_4 = arith.constant 0 : index
    %2 = vector.load %arg6[%c0_3, %c0_4] : memref<8x16xf32, #tpu.memory_space<vmem>>, vector<8x16xf32>
    %c0_5 = arith.constant 0 : index
    %c0_6 = arith.constant 0 : index
    %3 = vector.load %arg7[%c0_5, %c0_6] : memref<16x8xf32, #tpu.memory_space<vmem>>, vector<16x8xf32>
    %c0_7 = arith.constant 0 : index
    %c0_8 = arith.constant 0 : index
    %4 = vector.load %arg8[%c0_7, %c0_8] : memref<16x16xf32, #tpu.memory_space<vmem>>, vector<16x16xf32>
    %c0_9 = arith.constant 0 : index
    %c0_10 = arith.constant 0 : index
    %5 = vector.load %arg9[%c0_9, %c0_10] : memref<8x8xf32, #tpu.memory_space<vmem>>, vector<8x8xf32>
    %c0_11 = arith.constant 0 : index
    %c0_12 = arith.constant 0 : index
    %c0_13 = arith.constant 0 : index
    %c0_14 = arith.constant 0 : index
    %6 = vector.load %arg3[%c0_11, %c0_12, %c0_13, %c0_14] : memref<2x3x16x16xf32, #tpu.memory_space<vmem>>, vector<1x1x16x16xf32>
    %7 = vector.shape_cast %6 : vector<1x1x16x16xf32> to vector<16x16xf32>
    %c0_15 = arith.constant 0 : index
    %c1 = arith.constant 1 : index
    %c0_16 = arith.constant 0 : index
    %c0_17 = arith.constant 0 : index
    %8 = vector.load %arg3[%c0_15, %c1, %c0_16, %c0_17] : memref<2x3x16x16xf32, #tpu.memory_space<vmem>>, vector<1x1x16x16xf32>
    %9 = vector.shape_cast %8 : vector<1x1x16x16xf32> to vector<16x16xf32>
    %c0_18 = arith.constant 0 : index
    %c2 = arith.constant 2 : index
    %c0_19 = arith.constant 0 : index
    %c0_20 = arith.constant 0 : index
    %10 = vector.load %arg3[%c0_18, %c2, %c0_19, %c0_20] : memref<2x3x16x16xf32, #tpu.memory_space<vmem>>, vector<1x1x16x16xf32>
    %11 = vector.shape_cast %10 : vector<1x1x16x16xf32> to vector<16x16xf32>
    %cst = arith.constant 7.624500e+01 : f32
    %12 = vector.broadcast %cst : f32 to vector<16x16xf32>
    %13 = arith.mulf %12, %7 : vector<16x16xf32>
    %cst_21 = arith.constant 1.496850e+02 : f32
    %14 = vector.broadcast %cst_21 : f32 to vector<16x16xf32>
    %15 = arith.mulf %14, %9 : vector<16x16xf32>
    %16 = arith.addf %13, %15 : vector<16x16xf32>
    %cst_22 = arith.constant 2.907000e+01 : f32
    %17 = vector.broadcast %cst_22 : f32 to vector<16x16xf32>
    %18 = arith.mulf %17, %11 : vector<16x16xf32>
    %19 = arith.addf %16, %18 : vector<16x16xf32>
    %cst_23 = arith.constant 1.280000e+02 : f32
    %20 = vector.broadcast %cst_23 : f32 to vector<16x16xf32>
    %21 = arith.subf %19, %20 : vector<16x16xf32>
    %cst_24 = arith.constant -43.0276794 : f32
    %22 = vector.broadcast %cst_24 : f32 to vector<16x16xf32>
    %23 = arith.mulf %22, %7 : vector<16x16xf32>
    %cst_25 = arith.constant -84.4723205 : f32
    %24 = vector.broadcast %cst_25 : f32 to vector<16x16xf32>
    %25 = arith.mulf %24, %9 : vector<16x16xf32>
    %26 = arith.addf %23, %25 : vector<16x16xf32>
    %cst_26 = arith.constant 1.275000e+02 : f32
    %27 = vector.broadcast %cst_26 : f32 to vector<16x16xf32>
    %28 = arith.mulf %27, %11 : vector<16x16xf32>
    %29 = arith.addf %26, %28 : vector<16x16xf32>
    %cst_27 = arith.constant 1.275000e+02 : f32
    %30 = vector.broadcast %cst_27 : f32 to vector<16x16xf32>
    %31 = arith.mulf %30, %7 : vector<16x16xf32>
    %cst_28 = arith.constant -106.765442 : f32
    %32 = vector.broadcast %cst_28 : f32 to vector<16x16xf32>
    %33 = arith.mulf %32, %9 : vector<16x16xf32>
    %34 = arith.addf %31, %33 : vector<16x16xf32>
    %cst_29 = arith.constant -20.73456 : f32
    %35 = vector.broadcast %cst_29 : f32 to vector<16x16xf32>
    %36 = arith.mulf %35, %11 : vector<16x16xf32>
    %37 = arith.addf %34, %36 : vector<16x16xf32>
    %cst_30 = arith.constant dense<0.000000e+00> : vector<16x16xf32>
    %38 = tpu.matmul %0, %21, %cst_30 {dimension_numbers = #tpu.dot_dimension_numbers<[1], [0], [0], [1], [0, 0, 1, 1], [], []>} : vector<16x16xf32>, vector<16x16xf32>, vector<16x16xf32> -> vector<16x16xf32>
    %cst_31 = arith.constant dense<0.000000e+00> : vector<16x16xf32>
    %39 = tpu.matmul %38, %1, %cst_31 {dimension_numbers = #tpu.dot_dimension_numbers<[1], [0], [0], [1], [0, 0, 1, 1], [], []>} : vector<16x16xf32>, vector<16x16xf32>, vector<16x16xf32> -> vector<16x16xf32>
    %40 = arith.mulf %39, %4 : vector<16x16xf32>
    %41 = math.roundeven %40 : vector<16x16xf32>
    %c0_32 = arith.constant 0 : index
    %c0_33 = arith.constant 0 : index
    %c0_34 = arith.constant 0 : index
    %42 = vector.load %arg10[%c0_32, %c0_33, %c0_34] : memref<2x16x16xf32, #tpu.memory_space<vmem>>, vector<1x16x16xf32>
    %43 = vector.shape_cast %42 : vector<1x16x16xf32> to vector<16x16xf32>
    %44 = vector.shape_cast %41 : vector<16x16xf32> to vector<1x16x16xf32>
    tpu.vector_store %arg10[%c0_32, %c0_33, %c0_34], %44 {strides = array<i32>} : memref<2x16x16xf32, #tpu.memory_space<vmem>>, vector<1x16x16xf32>,
    %cst_35 = arith.constant dense<0.000000e+00> : vector<8x16xf32>
    %45 = tpu.matmul %2, %29, %cst_35 {dimension_numbers = #tpu.dot_dimension_numbers<[1], [0], [0], [1], [0, 0, 1, 1], [], []>} : vector<8x16xf32>, vector<16x16xf32>, vector<8x16xf32> -> vector<8x16xf32>
    %cst_36 = arith.constant dense<0.000000e+00> : vector<8x8xf32>
    %46 = tpu.matmul %45, %3, %cst_36 {dimension_numbers = #tpu.dot_dimension_numbers<[1], [0], [0], [1], [0, 0, 1, 1], [], []>} : vector<8x16xf32>, vector<16x8xf32>, vector<8x8xf32> -> vector<8x8xf32>
    %47 = arith.mulf %46, %5 : vector<8x8xf32>
    %48 = math.roundeven %47 : vector<8x8xf32>
    %c0_37 = arith.constant 0 : index
    %c0_38 = arith.constant 0 : index
    %c0_39 = arith.constant 0 : index
    %49 = vector.load %arg11[%c0_37, %c0_38, %c0_39] : memref<2x8x8xf32, #tpu.memory_space<vmem>>, vector<1x8x8xf32>
    %50 = vector.shape_cast %49 : vector<1x8x8xf32> to vector<8x8xf32>
    %51 = vector.shape_cast %48 : vector<8x8xf32> to vector<1x8x8xf32>
    tpu.vector_store %arg11[%c0_37, %c0_38, %c0_39], %51 {strides = array<i32>} : memref<2x8x8xf32, #tpu.memory_space<vmem>>, vector<1x8x8xf32>,
    %cst_40 = arith.constant dense<0.000000e+00> : vector<8x16xf32>
    %52 = tpu.matmul %2, %37, %cst_40 {dimension_numbers = #tpu.dot_dimension_numbers<[1], [0], [0], [1], [0, 0, 1, 1], [], []>} : vector<8x16xf32>, vector<16x16xf32>, vector<8x16xf32> -> vector<8x16xf32>
    %cst_41 = arith.constant dense<0.000000e+00> : vector<8x8xf32>
    %53 = tpu.matmul %52, %3, %cst_41 {dimension_numbers = #tpu.dot_dimension_numbers<[1], [0], [0], [1], [0, 0, 1, 1], [], []>} : vector<8x16xf32>, vector<16x8xf32>, vector<8x8xf32> -> vector<8x8xf32>
    %54 = arith.mulf %53, %5 : vector<8x8xf32>
    %55 = math.roundeven %54 : vector<8x8xf32>
    %c0_42 = arith.constant 0 : index
    %c0_43 = arith.constant 0 : index
    %c0_44 = arith.constant 0 : index
    %56 = vector.load %arg12[%c0_42, %c0_43, %c0_44] : memref<2x8x8xf32, #tpu.memory_space<vmem>>, vector<1x8x8xf32>
    %57 = vector.shape_cast %56 : vector<1x8x8xf32> to vector<8x8xf32>
    %58 = vector.shape_cast %55 : vector<8x8xf32> to vector<1x8x8xf32>
    tpu.vector_store %arg12[%c0_42, %c0_43, %c0_44], %58 {strides = array<i32>} : memref<2x8x8xf32, #tpu.memory_space<vmem>>, vector<1x8x8xf32>,
    %c1_45 = arith.constant 1 : index
    %c0_46 = arith.constant 0 : index
    %c0_47 = arith.constant 0 : index
    %c0_48 = arith.constant 0 : index
    %59 = vector.load %arg3[%c1_45, %c0_46, %c0_47, %c0_48] : memref<2x3x16x16xf32, #tpu.memory_space<vmem>>, vector<1x1x16x16xf32>
    %60 = vector.shape_cast %59 : vector<1x1x16x16xf32> to vector<16x16xf32>
    %c1_49 = arith.constant 1 : index
    %c1_50 = arith.constant 1 : index
    %c0_51 = arith.constant 0 : index
    %c0_52 = arith.constant 0 : index
    %61 = vector.load %arg3[%c1_49, %c1_50, %c0_51, %c0_52] : memref<2x3x16x16xf32, #tpu.memory_space<vmem>>, vector<1x1x16x16xf32>
    %62 = vector.shape_cast %61 : vector<1x1x16x16xf32> to vector<16x16xf32>
    %c1_53 = arith.constant 1 : index
    %c2_54 = arith.constant 2 : index
    %c0_55 = arith.constant 0 : index
    %c0_56 = arith.constant 0 : index
    %63 = vector.load %arg3[%c1_53, %c2_54, %c0_55, %c0_56] : memref<2x3x16x16xf32, #tpu.memory_space<vmem>>, vector<1x1x16x16xf32>
    %64 = vector.shape_cast %63 : vector<1x1x16x16xf32> to vector<16x16xf32>
    %cst_57 = arith.constant 7.624500e+01 : f32
    %65 = vector.broadcast %cst_57 : f32 to vector<16x16xf32>
    %66 = arith.mulf %65, %60 : vector<16x16xf32>
    %cst_58 = arith.constant 1.496850e+02 : f32
    %67 = vector.broadcast %cst_58 : f32 to vector<16x16xf32>
    %68 = arith.mulf %67, %62 : vector<16x16xf32>
    %69 = arith.addf %66, %68 : vector<16x16xf32>
    %cst_59 = arith.constant 2.907000e+01 : f32
    %70 = vector.broadcast %cst_59 : f32 to vector<16x16xf32>
    %71 = arith.mulf %70, %64 : vector<16x16xf32>
    %72 = arith.addf %69, %71 : vector<16x16xf32>
    %cst_60 = arith.constant 1.280000e+02 : f32
    %73 = vector.broadcast %cst_60 : f32 to vector<16x16xf32>
    %74 = arith.subf %72, %73 : vector<16x16xf32>
    %cst_61 = arith.constant -43.0276794 : f32
    %75 = vector.broadcast %cst_61 : f32 to vector<16x16xf32>
    %76 = arith.mulf %75, %60 : vector<16x16xf32>
    %cst_62 = arith.constant -84.4723205 : f32
    %77 = vector.broadcast %cst_62 : f32 to vector<16x16xf32>
    %78 = arith.mulf %77, %62 : vector<16x16xf32>
    %79 = arith.addf %76, %78 : vector<16x16xf32>
    %cst_63 = arith.constant 1.275000e+02 : f32
    %80 = vector.broadcast %cst_63 : f32 to vector<16x16xf32>
    %81 = arith.mulf %80, %64 : vector<16x16xf32>
    %82 = arith.addf %79, %81 : vector<16x16xf32>
    %cst_64 = arith.constant 1.275000e+02 : f32
    %83 = vector.broadcast %cst_64 : f32 to vector<16x16xf32>
    %84 = arith.mulf %83, %60 : vector<16x16xf32>
    %cst_65 = arith.constant -106.765442 : f32
    %85 = vector.broadcast %cst_65 : f32 to vector<16x16xf32>
    %86 = arith.mulf %85, %62 : vector<16x16xf32>
    %87 = arith.addf %84, %86 : vector<16x16xf32>
    %cst_66 = arith.constant -20.73456 : f32
    %88 = vector.broadcast %cst_66 : f32 to vector<16x16xf32>
    %89 = arith.mulf %88, %64 : vector<16x16xf32>
    %90 = arith.addf %87, %89 : vector<16x16xf32>
    %cst_67 = arith.constant dense<0.000000e+00> : vector<16x16xf32>
    %91 = tpu.matmul %0, %74, %cst_67 {dimension_numbers = #tpu.dot_dimension_numbers<[1], [0], [0], [1], [0, 0, 1, 1], [], []>} : vector<16x16xf32>, vector<16x16xf32>, vector<16x16xf32> -> vector<16x16xf32>
    %cst_68 = arith.constant dense<0.000000e+00> : vector<16x16xf32>
    %92 = tpu.matmul %91, %1, %cst_68 {dimension_numbers = #tpu.dot_dimension_numbers<[1], [0], [0], [1], [0, 0, 1, 1], [], []>} : vector<16x16xf32>, vector<16x16xf32>, vector<16x16xf32> -> vector<16x16xf32>
    %93 = arith.mulf %92, %4 : vector<16x16xf32>
    %94 = math.roundeven %93 : vector<16x16xf32>
    %c1_69 = arith.constant 1 : index
    %c0_70 = arith.constant 0 : index
    %c0_71 = arith.constant 0 : index
    %95 = vector.load %arg10[%c1_69, %c0_70, %c0_71] : memref<2x16x16xf32, #tpu.memory_space<vmem>>, vector<1x16x16xf32>
    %96 = vector.shape_cast %95 : vector<1x16x16xf32> to vector<16x16xf32>
    %97 = vector.shape_cast %94 : vector<16x16xf32> to vector<1x16x16xf32>
    tpu.vector_store %arg10[%c1_69, %c0_70, %c0_71], %97 {strides = array<i32>} : memref<2x16x16xf32, #tpu.memory_space<vmem>>, vector<1x16x16xf32>,
    %cst_72 = arith.constant dense<0.000000e+00> : vector<8x16xf32>
    %98 = tpu.matmul %2, %82, %cst_72 {dimension_numbers = #tpu.dot_dimension_numbers<[1], [0], [0], [1], [0, 0, 1, 1], [], []>} : vector<8x16xf32>, vector<16x16xf32>, vector<8x16xf32> -> vector<8x16xf32>
    %cst_73 = arith.constant dense<0.000000e+00> : vector<8x8xf32>
    %99 = tpu.matmul %98, %3, %cst_73 {dimension_numbers = #tpu.dot_dimension_numbers<[1], [0], [0], [1], [0, 0, 1, 1], [], []>} : vector<8x16xf32>, vector<16x8xf32>, vector<8x8xf32> -> vector<8x8xf32>
    %100 = arith.mulf %99, %5 : vector<8x8xf32>
    %101 = math.roundeven %100 : vector<8x8xf32>
    %c1_74 = arith.constant 1 : index
    %c0_75 = arith.constant 0 : index
    %c0_76 = arith.constant 0 : index
    %102 = vector.load %arg11[%c1_74, %c0_75, %c0_76] : memref<2x8x8xf32, #tpu.memory_space<vmem>>, vector<1x8x8xf32>
    %103 = vector.shape_cast %102 : vector<1x8x8xf32> to vector<8x8xf32>
    %104 = vector.shape_cast %101 : vector<8x8xf32> to vector<1x8x8xf32>
    tpu.vector_store %arg11[%c1_74, %c0_75, %c0_76], %104 {strides = array<i32>} : memref<2x8x8xf32, #tpu.memory_space<vmem>>, vector<1x8x8xf32>,
    %cst_77 = arith.constant dense<0.000000e+00> : vector<8x16xf32>
    %105 = tpu.matmul %2, %90, %cst_77 {dimension_numbers = #tpu.dot_dimension_numbers<[1], [0], [0], [1], [0, 0, 1, 1], [], []>} : vector<8x16xf32>, vector<16x16xf32>, vector<8x16xf32> -> vector<8x16xf32>
    %cst_78 = arith.constant dense<0.000000e+00> : vector<8x8xf32>
    %106 = tpu.matmul %105, %3, %cst_78 {dimension_numbers = #tpu.dot_dimension_numbers<[1], [0], [0], [1], [0, 0, 1, 1], [], []>} : vector<8x16xf32>, vector<16x8xf32>, vector<8x8xf32> -> vector<8x8xf32>
    %107 = arith.mulf %106, %5 : vector<8x8xf32>
    %108 = math.roundeven %107 : vector<8x8xf32>
    %c1_79 = arith.constant 1 : index
    %c0_80 = arith.constant 0 : index
    %c0_81 = arith.constant 0 : index
    %109 = vector.load %arg12[%c1_79, %c0_80, %c0_81] : memref<2x8x8xf32, #tpu.memory_space<vmem>>, vector<1x8x8xf32>
    %110 = vector.shape_cast %109 : vector<1x8x8xf32> to vector<8x8xf32>
    %111 = vector.shape_cast %108 : vector<8x8xf32> to vector<1x8x8xf32>
    tpu.vector_store %arg12[%c1_79, %c0_80, %c0_81], %111 {strides = array<i32>} : memref<2x8x8xf32, #tpu.memory_space<vmem>>, vector<1x8x8xf32>,
    return
  }
  func.func @transform_0(%arg0: i32, %arg1: i32, %arg2: i32) -> (i32, i32, i32, i32) {
    %c0_i32 = arith.constant 0 : i32
    %c0_i32_0 = arith.constant 0 : i32
    return %arg0, %c0_i32, %arg1, %arg2 : i32, i32, i32, i32
  }
  func.func @transform_1(%arg0: i32, %arg1: i32, %arg2: i32) -> (i32, i32) {
    %c0_i32 = arith.constant 0 : i32
    %c0_i32_0 = arith.constant 0 : i32
    %c0_i32_1 = arith.constant 0 : i32
    return %c0_i32, %c0_i32_0 : i32, i32
  }
  func.func @transform_2(%arg0: i32, %arg1: i32, %arg2: i32) -> (i32, i32) {
    %c0_i32 = arith.constant 0 : i32
    %c0_i32_0 = arith.constant 0 : i32
    %c0_i32_1 = arith.constant 0 : i32
    return %c0_i32, %c0_i32_0 : i32, i32
  }
  func.func @transform_3(%arg0: i32, %arg1: i32, %arg2: i32) -> (i32, i32) {
    %c0_i32 = arith.constant 0 : i32
    %c0_i32_0 = arith.constant 0 : i32
    %c0_i32_1 = arith.constant 0 : i32
    return %c0_i32, %c0_i32_0 : i32, i32
  }
  func.func @transform_4(%arg0: i32, %arg1: i32, %arg2: i32) -> (i32, i32) {
    %c0_i32 = arith.constant 0 : i32
    %c0_i32_0 = arith.constant 0 : i32
    %c0_i32_1 = arith.constant 0 : i32
    return %c0_i32, %c0_i32_0 : i32, i32
  }
  func.func @transform_5(%arg0: i32, %arg1: i32, %arg2: i32) -> (i32, i32) {
    %c0_i32 = arith.constant 0 : i32
    %c0_i32_0 = arith.constant 0 : i32
    %c0_i32_1 = arith.constant 0 : i32
    return %c0_i32, %c0_i32_0 : i32, i32
  }
  func.func @transform_6(%arg0: i32, %arg1: i32, %arg2: i32) -> (i32, i32) {
    %c0_i32 = arith.constant 0 : i32
    %c0_i32_0 = arith.constant 0 : i32
    %c0_i32_1 = arith.constant 0 : i32
    return %c0_i32, %c0_i32_0 : i32, i32
  }
  func.func @transform_7(%arg0: i32, %arg1: i32, %arg2: i32) -> (i32, i32, i32) {
    %c0_i32 = arith.constant 0 : i32
    return %arg0, %arg1, %arg2 : i32, i32, i32
  }
  func.func @transform_8(%arg0: i32, %arg1: i32, %arg2: i32) -> (i32, i32, i32) {
    %c0_i32 = arith.constant 0 : i32
    return %arg0, %arg1, %arg2 : i32, i32, i32
  }
  func.func @transform_9(%arg0: i32, %arg1: i32, %arg2: i32) -> (i32, i32, i32) {
    %c0_i32 = arith.constant 0 : i32
    return %arg0, %arg1, %arg2 : i32, i32, i32
  }
}

</mosaic_0001>

<llo_original>
// kernel: tpu_custom_call.1
$region0: #{tpu_custom_call.1}
  #allocation0 [shape = 'u32[]', space=smem, size = 0x4, offset = 0x4, fixed_abs, tag = 'smem constant byte address 0x4 - core index']
  #allocation1 [shape = 'u32[144,128]{1,0:T(1,128)}', space=vmem, size = 0x12000, scoped, tag = 'internal scratch']
  %s0 = inlined_call_operand.hbm [shape: f32[2,3,16,16], index: 0, kind: input, shape index: {}]
  %s1 = inlined_call_operand.vmem [shape: f32[16,16], index: 1, kind: input, shape index: {}]
  %s2 = inlined_call_operand.hbm [shape: f32[16,16], index: 2, kind: input, shape index: {}]
  %s3 = inlined_call_operand.hbm [shape: f32[8,16], index: 3, kind: input, shape index: {}]
  %s4 = inlined_call_operand.vmem [shape: f32[16,8], index: 4, kind: input, shape index: {}]
  %s5 = inlined_call_operand.vmem [shape: f32[16,16], index: 5, kind: input, shape index: {}]
  %s6 = inlined_call_operand.vmem [shape: f32[8,8], index: 6, kind: input, shape index: {}]
  %s7 = inlined_call_operand.hbm [shape: f32[2,16,16], index: 7, kind: output, shape index: {0}]
  %s8 = inlined_call_operand.hbm [shape: f32[2,8,8], index: 8, kind: output, shape index: {1}]
  %s9 = inlined_call_operand.hbm [shape: f32[2,8,8], index: 9, kind: output, shape index: {2}]
  %10 = xla_tuple %s7, %s8, %s9
  %s11 = sld [smem:[#allocation0]]
  $region66: #{tpu_custom_call.1} parent=0
    _
  %s13 = ssub.s32 1, %s11
  %s14 = scalar_select 0, %s13, %s11
  $region1: #{tpu_custom_call.1} parent=0
    #allocation2 [shape = 'u8[49152]{0}', space=vmem, size = 0xc000, scoped, tag = 'input window, operand 0, single buffered']
    #allocation3 [shape = 's32[1]{0}', space=sflag, size = 0x4, scoped, tag = 'scoped memory for tpu_custom_call.1']
    #allocation4 [shape = 's32[1]{0}', space=sflag, size = 0x4, scoped, tag = 'scoped memory for tpu_custom_call.1']
    #allocation5 [shape = 'u8[8192]{0}', space=vmem, size = 0x2000, scoped, tag = 'input window, operand 2, single buffered']
    #allocation6 [shape = 's32[1]{0}', space=sflag, size = 0x4, scoped, tag = 'scoped memory for tpu_custom_call.1']
    #allocation7 [shape = 'u8[4096]{0}', space=vmem, size = 0x1000, scoped, tag = 'input window, operand 3, single buffered']
    #allocation8 [shape = 'u8[16384]{0}', space=vmem, size = 0x4000, scoped, tag = 'output window, operand 0, single buffered']
    #allocation9 [shape = 'u8[8192]{0}', space=vmem, size = 0x2000, scoped, tag = 'output window, operand 1, single buffered']
    #allocation10 [shape = 's32[1]{0}', space=sflag, size = 0x4, scoped, tag = 'scoped memory for tpu_custom_call.1']
    #allocation11 [shape = 'u8[8192]{0}', space=vmem, size = 0x2000, scoped, tag = 'output window, operand 2, single buffered']
    %15 = vsyncpa [#allocation3], 0
    %16 = vsyncpa [#allocation6], 0
    %17 = vsyncpa [#allocation4], 0
    %18 = vsyncpa [#allocation10], 0
    // Predicated region
    $region2: #{tpu_custom_call.1} parent=1 // pred_check
      _
    $region3: #{tpu_custom_call.1} parent=1 // pred_check_branch
      %20 = sbr.rel (0) target = $region5
    $region4: #{tpu_custom_call.1} parent=1 // pred_region
      %s22 = ssub.s32 1536, 1536
      %23 = vsyncadd [#allocation3], %s22
      %s24 = sshll.u32 [#allocation2], 4
      %s25 = int_to_ptr.vmem [resolvable:$true] %s24
      %30 = dma.hbm_to_vmem [thread:$0]  %s0, 1536, %s25, [#allocation3], 128, 128, 8
    $region5: #{tpu_custom_call.1} parent=1 // pred_fallthru
      _
    // Predicated region
    $region6: #{tpu_custom_call.1} parent=1 // pred_check
      _
    $region7: #{tpu_custom_call.1} parent=1 // pred_check_branch
      %32 = sbr.rel (0) target = $region9
    $region8: #{tpu_custom_call.1} parent=1 // pred_region
      _
    $region9: #{tpu_custom_call.1} parent=1 // pred_fallthru
      _
    // Predicated region
    $region10: #{tpu_custom_call.1} parent=1 // pred_check
      _
    $region11: #{tpu_custom_call.1} parent=1 // pred_check_branch
      %34 = sbr.rel (0) target = $region13
    $region12: #{tpu_custom_call.1} parent=1 // pred_region
      %s36 = ssub.s32 256, 256
      %37 = vsyncadd [#allocation6], %s36
      %s38 = sshll.u32 [#allocation5], 4
      %s39 = int_to_ptr.vmem [resolvable:$true] %s38
      %44 = dma.hbm_to_vmem [thread:$0]  %s2, 256, %s39, [#allocation6], 128, 128, 8
    $region13: #{tpu_custom_call.1} parent=1 // pred_fallthru
      _
    // Predicated region
    $region14: #{tpu_custom_call.1} parent=1 // pred_check
      _
    $region15: #{tpu_custom_call.1} parent=1 // pred_check_branch
      %46 = sbr.rel (0) target = $region17
    $region16: #{tpu_custom_call.1} parent=1 // pred_region
      %s48 = ssub.s32 128, 128
      %49 = vsyncadd [#allocation6], %s48
      %s51 = sshll.u32 [#allocation7], 4
      %s52 = int_to_ptr.vmem [resolvable:$true] %s51
      %54 = dma.hbm_to_vmem [thread:$0]  %s3, 128, %s52, [#allocation6]
    $region17: #{tpu_custom_call.1} parent=1 // pred_fallthru
      _
    // Predicated region
    $region18: #{tpu_custom_call.1} parent=1 // pred_check
      _
    $region19: #{tpu_custom_call.1} parent=1 // pred_check_branch
      %56 = sbr.rel (0) target = $region21
    $region20: #{tpu_custom_call.1} parent=1 // pred_region
      _
    $region21: #{tpu_custom_call.1} parent=1 // pred_fallthru
      _
    // Predicated region
    $region22: #{tpu_custom_call.1} parent=1 // pred_check
      _
    $region23: #{tpu_custom_call.1} parent=1 // pred_check_branch
      %58 = sbr.rel (0) target = $region25
    $region24: #{tpu_custom_call.1} parent=1 // pred_region
      _
    $region25: #{tpu_custom_call.1} parent=1 // pred_fallthru
      _
    // Predicated region
    $region26: #{tpu_custom_call.1} parent=1 // pred_check
      _
    $region27: #{tpu_custom_call.1} parent=1 // pred_check_branch
      %60 = sbr.rel (0) target = $region29
    $region28: #{tpu_custom_call.1} parent=1 // pred_region
      _
    $region29: #{tpu_custom_call.1} parent=1 // pred_fallthru
      _
    // Predicated region
    $region30: #{tpu_custom_call.1} parent=1 // pred_check
      _
    $region31: #{tpu_custom_call.1} parent=1 // pred_check_branch
      %62 = sbr.rel (0) target = $region33
    $region32: #{tpu_custom_call.1} parent=1 // pred_region
      %63 = dma.done [#allocation3], 1536
    $region33: #{tpu_custom_call.1} parent=1 // pred_fallthru
      _
    // Predicated region
    $region34: #{tpu_custom_call.1} parent=1 // pred_check
      _
    $region35: #{tpu_custom_call.1} parent=1 // pred_check_branch
      %65 = sbr.rel (0) target = $region37
    $region36: #{tpu_custom_call.1} parent=1 // pred_region
      %66 = dma.done [#allocation6], 256
    $region37: #{tpu_custom_call.1} parent=1 // pred_fallthru
      _
    // Predicated region
    $region38: #{tpu_custom_call.1} parent=1 // pred_check
      _
    $region39: #{tpu_custom_call.1} parent=1 // pred_check_branch
      %68 = sbr.rel (0) target = $region41
    $region40: #{tpu_custom_call.1} parent=1 // pred_region
      %69 = dma.done [#allocation6], 128
    $region41: #{tpu_custom_call.1} parent=1 // pred_fallthru
      _
    %v70 = vld [vmem:[%s1] sm:$0xff]
    %v71 = vld [vmem:[%s1 + $0x8] sm:$0xff]
    %v72 = vld [vmem:[#allocation5] sm:$0xff]
    %v73 = vld [vmem:[#allocation5 + $0x8] sm:$0xff]
    %v74 = vld [vmem:[#allocation7] sm:$0xff]
    %v75 = vld [vmem:[%s4] sm:$0xff]
    %v76 = vld [vmem:[%s4 + $0x8] sm:$0xff]
    %v77 = vld [vmem:[%s5] sm:$0xff]
    %v78 = vld [vmem:[%s5 + $0x8] sm:$0xff]
    %v79 = vld [vmem:[%s6] sm:$0xff]
    %v80 = vld [vmem:[#allocation2] sm:$0xff]
    %v81 = vld [vmem:[#allocation2 + $0x8] sm:$0xff]
    %s82 = scalar_lea.vmem [#allocation2], 16
    %v83 = vld [vmem:[%s82] sm:$0xff]
    %v84 = vld [vmem:[%s82 + $0x8] sm:$0xff]
    %s85 = scalar_lea.vmem [#allocation2], 32
    %v86 = vld [vmem:[%s85] sm:$0xff]
    %v87 = vld [vmem:[%s85 + $0x8] sm:$0xff]
    %v88 = vmul.f32 %v80, 76.245
    %v89 = vmul.f32 %v81, 76.245
    %v90 = vmul.f32 %v83, 149.685
    %v91 = vmul.f32 %v84, 149.685
    %v92 = vadd.f32 %v88, %v90
    %v93 = vadd.f32 %v89, %v91
    %v94 = vmul.f32 %v86, 29.07
    %v95 = vmul.f32 %v87, 29.07
    %v96 = vadd.f32 %v92, %v94
    %v97 = vadd.f32 %v93, %v95
    %v98 = vsub.f32 %v96, 128.0
    %v99 = vsub.f32 %v97, 128.0
    %v100 = vmul.f32 %v80, -43.02768
    %v101 = vmul.f32 %v81, -43.02768
    %v102 = vmul.f32 %v83, -84.47232
    %v103 = vmul.f32 %v84, -84.47232
    %v104 = vadd.f32 %v100, %v102
    %v105 = vadd.f32 %v101, %v103
    %v106 = vmul.f32 %v86, 127.5
    %v107 = vmul.f32 %v87, 127.5
    %v108 = vadd.f32 %v104, %v106
    %v109 = vadd.f32 %v105, %v107
    %v110 = vmul.f32 %v80, 127.5
    %v111 = vmul.f32 %v81, 127.5
    %v112 = vmul.f32 %v83, -106.76544
    %v113 = vmul.f32 %v84, -106.76544
    %v114 = vadd.f32 %v110, %v112
    %v115 = vadd.f32 %v111, %v113
    %v116 = vmul.f32 %v86, -20.73456
    %v117 = vmul.f32 %v87, -20.73456
    %v118 = vadd.f32 %v114, %v116
    %v119 = vadd.f32 %v115, %v117
    %vm120 = vcmask 130048
    %v122 = vsel %vm120, %v70, 0
    %v125 = vsel %vm120, %v71, 0
    %127 = vmatprep.subr.mxu0 0.0
    %128 = vmatpush1.msra.mxu0 %v98
    %129 = vmatprep.subr.mxu0 0.0
    %130 = vmatpush1.msra.mxu0 %v99
    %131 = vmatprep.subr.mxu0 0.0
    %132 = vmatpush1.msra.mxu0 0.0
    %133 = vmatprep.subr.mxu0 0.0
    %134 = vmatpush1.msra.mxu0 0.0
    %135 = vmatprep.subr.mxu0 0.0
    %136 = vmatpush1.msra.mxu0 0.0
    %137 = vmatprep.subr.mxu0 0.0
    %138 = vmatpush1.msra.mxu0 0.0
    %139 = vmatprep.subr.mxu0 0.0
    %140 = vmatpush1.msra.mxu0 0.0
    %141 = vmatprep.subr.mxu0 0.0
    %142 = vmatpush1.msra.mxu0 0.0
    %143 = vmatprep.subr.mxu0 0.0
    %144 = vmatpush1.msra.mxu0 0.0
    %145 = vmatprep.subr.mxu0 0.0
    %146 = vmatpush1.msra.mxu0 0.0
    %147 = vmatprep.subr.mxu0 0.0
    %148 = vmatpush1.msra.mxu0 0.0
    %149 = vmatprep.subr.mxu0 0.0
    %150 = vmatpush1.msra.mxu0 0.0
    %151 = vmatprep.subr.mxu0 0.0
    %152 = vmatpush1.msra.mxu0 0.0
    %153 = vmatprep.subr.mxu0 0.0
    %154 = vmatpush1.msra.mxu0 0.0
    %155 = vmatprep.subr.mxu0 0.0
    %156 = vmatpush1.msra.mxu0 0.0
    %157 = vmatprep.subr.mxu0 0.0
    %158 = vmatpush1.msra.mxu0 0.0
    %159 = vmatprep.subr.mxu0 0.0
    %160 = vmatpush1.msra.mxu0 0.0
    %161 = vmatprep.subr.mxu0 0.0
    %162 = vmatpush1.msra.mxu0 0.0
    %163 = vmatprep.subr.mxu0 0.0
    %164 = vmatpush1.msra.mxu0 0.0
    %165 = vmatprep.subr.mxu0 0.0
    %166 = vmatpush1.msra.mxu0 0.0
    %167 = vmatprep.subr.mxu0 0.0
    %168 = vmatpush1.msra.mxu0 0.0
    %169 = vmatprep.subr.mxu0 0.0
    %170 = vmatpush1.msra.mxu0 0.0
    %171 = vmatprep.subr.mxu0 0.0
    %172 = vmatpush1.msra.mxu0 0.0
    %173 = vmatprep.subr.mxu0 0.0
    %174 = vmatpush1.msra.mxu0 0.0
    %175 = vmatprep.subr.mxu0 0.0
    %176 = vmatpush1.msra.mxu0 0.0
    %177 = vmatprep.subr.mxu0 0.0
    %178 = vmatpush1.msra.mxu0 0.0
    %179 = vmatprep.subr.mxu0 0.0
    %180 = vmatpush1.msra.mxu0 0.0
    %181 = vmatprep.subr.mxu0 0.0
    %182 = vmatpush1.msra.mxu0 0.0
    %183 = vmatprep.subr.mxu0 0.0
    %184 = vmatpush1.msra.mxu0 0.0
    %185 = vmatprep.subr.mxu0 0.0
    %186 = vmatpush1.msra.mxu0 0.0
    %187 = vmatprep.subr.mxu0 0.0
    %188 = vmatpush1.msra.mxu0 0.0
    %189 = vmatprep.subr.mxu0 0.0
    %190 = vmatpush1.msra.mxu0 0.0
    %191 = vmatprep.mubr.f32.mxu0 0.0
    %192 = vmatmul.mubr.f32.gmra.mrb[0].mxu0 %v122
    %v193 = vpop.f32.mrb[0].mxu0
    %v194 = vadd.f32 0.0, %v193
    %v195 = vpop.f32.mrb[0].mxu0
    %196 = vmatprep.mubr.f32.mxu0 0.0
    %197 = vmatmul.mubr.f32.gmra.mrb[0].mxu0 %v125
    %v198 = vpop.f32.mrb[0].mxu0
    %v199 = vadd.f32 0.0, %v198
    %v200 = vpop.f32.mrb[0].mxu0
    %201 = vdwg.mxu0
    %v203 = vsel %vm120, %v194, 0
    %v206 = vsel %vm120, %v199, 0
    %208 = vmatprep.subr.mxu0 0.0
    %209 = vmatpush1.msra.mxu0 %v72
    %210 = vmatprep.subr.mxu0 0.0
    %211 = vmatpush1.msra.mxu0 %v73
    %212 = vmatprep.subr.mxu0 0.0
    %213 = vmatpush1.msra.mxu0 0.0
    %214 = vmatprep.subr.mxu0 0.0
    %215 = vmatpush1.msra.mxu0 0.0
    %216 = vmatprep.subr.mxu0 0.0
    %217 = vmatpush1.msra.mxu0 0.0
    %218 = vmatprep.subr.mxu0 0.0
    %219 = vmatpush1.msra.mxu0 0.0
    %220 = vmatprep.subr.mxu0 0.0
    %221 = vmatpush1.msra.mxu0 0.0
    %222 = vmatprep.subr.mxu0 0.0
    %223 = vmatpush1.msra.mxu0 0.0
    %224 = vmatprep.subr.mxu0 0.0
    %225 = vmatpush1.msra.mxu0 0.0
    %226 = vmatprep.subr.mxu0 0.0
    %227 = vmatpush1.msra.mxu0 0.0
    %228 = vmatprep.subr.mxu0 0.0
    %229 = vmatpush1.msra.mxu0 0.0
    %230 = vmatprep.subr.mxu0 0.0
    %231 = vmatpush1.msra.mxu0 0.0
    %232 = vmatprep.subr.mxu0 0.0
    %233 = vmatpush1.msra.mxu0 0.0
    %234 = vmatprep.subr.mxu0 0.0
    %235 = vmatpush1.msra.mxu0 0.0
    %236 = vmatprep.subr.mxu0 0.0
    %237 = vmatpush1.msra.mxu0 0.0
    %238 = vmatprep.subr.mxu0 0.0
    %239 = vmatpush1.msra.mxu0 0.0
    %240 = vmatprep.subr.mxu0 0.0
    %241 = vmatpush1.msra.mxu0 0.0
    %242 = vmatprep.subr.mxu0 0.0
    %243 = vmatpush1.msra.mxu0 0.0
    %244 = vmatprep.subr.mxu0 0.0
    %245 = vmatpush1.msra.mxu0 0.0
    %246 = vmatprep.subr.mxu0 0.0
    %247 = vmatpush1.msra.mxu0 0.0
    %248 = vmatprep.subr.mxu0 0.0
    %249 = vmatpush1.msra.mxu0 0.0
    %250 = vmatprep.subr.mxu0 0.0
    %251 = vmatpush1.msra.mxu0 0.0
    %252 = vmatprep.subr.mxu0 0.0
    %253 = vmatpush1.msra.mxu0 0.0
    %254 = vmatprep.subr.mxu0 0.0
    %255 = vmatpush1.msra.mxu0 0.0
    %256 = vmatprep.subr.mxu0 0.0
    %257 = vmatpush1.msra.mxu0 0.0
    %258 = vmatprep.subr.mxu0 0.0
    %259 = vmatpush1.msra.mxu0 0.0
    %260 = vmatprep.subr.mxu0 0.0
    %261 = vmatpush1.msra.mxu0 0.0
    %262 = vmatprep.subr.mxu0 0.0
    %263 = vmatpush1.msra.mxu0 0.0
    %264 = vmatprep.subr.mxu0 0.0
    %265 = vmatpush1.msra.mxu0 0.0
    %266 = vmatprep.subr.mxu0 0.0
    %267 = vmatpush1.msra.mxu0 0.0
    %268 = vmatprep.subr.mxu0 0.0
    %269 = vmatpush1.msra.mxu0 0.0
    %270 = vmatprep.subr.mxu0 0.0
    %271 = vmatpush1.msra.mxu0 0.0
    %272 = vmatprep.mubr.f32.mxu0 0.0
    %273 = vmatmul.mubr.f32.gmra.mrb[0].mxu0 %v203
    %v274 = vpop.f32.mrb[0].mxu0
    %v275 = vadd.f32 0.0, %v274
    %v276 = vpop.f32.mrb[0].mxu0
    %277 = vmatprep.mubr.f32.mxu0 0.0
    %278 = vmatmul.mubr.f32.gmra.mrb[0].mxu0 %v206
    %v279 = vpop.f32.mrb[0].mxu0
    %v280 = vadd.f32 0.0, %v279
    %v281 = vpop.f32.mrb[0].mxu0
    %282 = vdwg.mxu0
    %v283 = vmul.f32 %v275, %v77
    %v284 = vmul.f32 %v280, %v78
    %v285 = vround.ne.pseudo %v283
    %v286 = vround.ne.pseudo %v284
    %287 = vst.msk [vmem:[#allocation8] sm:$0xff] %vm120, %v285
    %288 = vst.msk [vmem:[#allocation8 + $0x8] sm:$0xff] %vm120, %v286
    %v290 = vsel %vm120, %v74, 0
    %292 = vmatprep.subr.mxu0 0.0
    %293 = vmatpush1.msra.mxu0 %v108
    %294 = vmatprep.subr.mxu0 0.0
    %295 = vmatpush1.msra.mxu0 %v109
    %296 = vmatprep.subr.mxu0 0.0
    %297 = vmatpush1.msra.mxu0 0.0
    %298 = vmatprep.subr.mxu0 0.0
    %299 = vmatpush1.msra.mxu0 0.0
    %300 = vmatprep.subr.mxu0 0.0
    %301 = vmatpush1.msra.mxu0 0.0
    %302 = vmatprep.subr.mxu0 0.0
    %303 = vmatpush1.msra.mxu0 0.0
    %304 = vmatprep.subr.mxu0 0.0
    %305 = vmatpush1.msra.mxu0 0.0
    %306 = vmatprep.subr.mxu0 0.0
    %307 = vmatpush1.msra.mxu0 0.0
    %308 = vmatprep.subr.mxu0 0.0
    %309 = vmatpush1.msra.mxu0 0.0
    %310 = vmatprep.subr.mxu0 0.0
    %311 = vmatpush1.msra.mxu0 0.0
    %312 = vmatprep.subr.mxu0 0.0
    %313 = vmatpush1.msra.mxu0 0.0
    %314 = vmatprep.subr.mxu0 0.0
    %315 = vmatpush1.msra.mxu0 0.0
    %316 = vmatprep.subr.mxu0 0.0
    %317 = vmatpush1.msra.mxu0 0.0
    %318 = vmatprep.subr.mxu0 0.0
    %319 = vmatpush1.msra.mxu0 0.0
    %320 = vmatprep.subr.mxu0 0.0
    %321 = vmatpush1.msra.mxu0 0.0
    %322 = vmatprep.subr.mxu0 0.0
    %323 = vmatpush1.msra.mxu0 0.0
    %324 = vmatprep.subr.mxu0 0.0
    %325 = vmatpush1.msra.mxu0 0.0
    %326 = vmatprep.subr.mxu0 0.0
    %327 = vmatpush1.msra.mxu0 0.0
    %328 = vmatprep.subr.mxu0 0.0
    %329 = vmatpush1.msra.mxu0 0.0
    %330 = vmatprep.subr.mxu0 0.0
    %331 = vmatpush1.msra.mxu0 0.0
    %332 = vmatprep.subr.mxu0 0.0
    %333 = vmatpush1.msra.mxu0 0.0
    %334 = vmatprep.subr.mxu0 0.0
    %335 = vmatpush1.msra.mxu0 0.0
    %336 = vmatprep.subr.mxu0 0.0
    %337 = vmatpush1.msra.mxu0 0.0
    %338 = vmatprep.subr.mxu0 0.0
    %339 = vmatpush1.msra.mxu0 0.0
    %340 = vmatprep.subr.mxu0 0.0
    %341 = vmatpush1.msra.mxu0 0.0
    %342 = vmatprep.subr.mxu0 0.0
    %343 = vmatpush1.msra.mxu0 0.0
    %344 = vmatprep.subr.mxu0 0.0
    %345 = vmatpush1.msra.mxu0 0.0
    %346 = vmatprep.subr.mxu0 0.0
    %347 = vmatpush1.msra.mxu0 0.0
    %348 = vmatprep.subr.mxu0 0.0
    %349 = vmatpush1.msra.mxu0 0.0
    %350 = vmatprep.subr.mxu0 0.0
    %351 = vmatpush1.msra.mxu0 0.0
    %352 = vmatprep.subr.mxu0 0.0
    %353 = vmatpush1.msra.mxu0 0.0
    %354 = vmatprep.subr.mxu0 0.0
    %355 = vmatpush1.msra.mxu0 0.0
    %356 = vmatprep.mubr.f32.mxu0 0.0
    %357 = vmatmul.mubr.f32.gmra.mrb[0].mxu0 %v290
    %v358 = vpop.f32.mrb[0].mxu0
    %v359 = vadd.f32 0.0, %v358
    %v360 = vpop.f32.mrb[0].mxu0
    %361 = vdwg.mxu0
    %v363 = vsel %vm120, %v359, 0
    %365 = vmatprep.subr.mxu0 0.0
    %366 = vmatpush1.msra.mxu0 %v75
    %367 = vmatprep.subr.mxu0 0.0
    %368 = vmatpush1.msra.mxu0 %v76
    %369 = vmatprep.subr.mxu0 0.0
    %370 = vmatpush1.msra.mxu0 0.0
    %371 = vmatprep.subr.mxu0 0.0
    %372 = vmatpush1.msra.mxu0 0.0
    %373 = vmatprep.subr.mxu0 0.0
    %374 = vmatpush1.msra.mxu0 0.0
    %375 = vmatprep.subr.mxu0 0.0
    %376 = vmatpush1.msra.mxu0 0.0
    %377 = vmatprep.subr.mxu0 0.0
    %378 = vmatpush1.msra.mxu0 0.0
    %379 = vmatprep.subr.mxu0 0.0
    %380 = vmatpush1.msra.mxu0 0.0
    %381 = vmatprep.subr.mxu0 0.0
    %382 = vmatpush1.msra.mxu0 0.0
    %383 = vmatprep.subr.mxu0 0.0
    %384 = vmatpush1.msra.mxu0 0.0
    %385 = vmatprep.subr.mxu0 0.0
    %386 = vmatpush1.msra.mxu0 0.0
    %387 = vmatprep.subr.mxu0 0.0
    %388 = vmatpush1.msra.mxu0 0.0
    %389 = vmatprep.subr.mxu0 0.0
    %390 = vmatpush1.msra.mxu0 0.0
    %391 = vmatprep.subr.mxu0 0.0
    %392 = vmatpush1.msra.mxu0 0.0
    %393 = vmatprep.subr.mxu0 0.0
    %394 = vmatpush1.msra.mxu0 0.0
    %395 = vmatprep.subr.mxu0 0.0
    %396 = vmatpush1.msra.mxu0 0.0
    %397 = vmatprep.subr.mxu0 0.0
    %398 = vmatpush1.msra.mxu0 0.0
    %399 = vmatprep.subr.mxu0 0.0
    %400 = vmatpush1.msra.mxu0 0.0
    %401 = vmatprep.subr.mxu0 0.0
    %402 = vmatpush1.msra.mxu0 0.0
    %403 = vmatprep.subr.mxu0 0.0
    %404 = vmatpush1.msra.mxu0 0.0
    %405 = vmatprep.subr.mxu0 0.0
    %406 = vmatpush1.msra.mxu0 0.0
    %407 = vmatprep.subr.mxu0 0.0
    %408 = vmatpush1.msra.mxu0 0.0
    %409 = vmatprep.subr.mxu0 0.0
    %410 = vmatpush1.msra.mxu0 0.0
    %411 = vmatprep.subr.mxu0 0.0
    %412 = vmatpush1.msra.mxu0 0.0
    %413 = vmatprep.subr.mxu0 0.0
    %414 = vmatpush1.msra.mxu0 0.0
    %415 = vmatprep.subr.mxu0 0.0
    %416 = vmatpush1.msra.mxu0 0.0
    %417 = vmatprep.subr.mxu0 0.0
    %418 = vmatpush1.msra.mxu0 0.0
    %419 = vmatprep.subr.mxu0 0.0
    %420 = vmatpush1.msra.mxu0 0.0
    %421 = vmatprep.subr.mxu0 0.0
    %422 = vmatpush1.msra.mxu0 0.0
    %423 = vmatprep.subr.mxu0 0.0
    %424 = vmatpush1.msra.mxu0 0.0
    %425 = vmatprep.subr.mxu0 0.0
    %426 = vmatpush1.msra.mxu0 0.0
    %427 = vmatprep.subr.mxu0 0.0
    %428 = vmatpush1.msra.mxu0 0.0
    %429 = vmatprep.mubr.f32.mxu0 0.0
    %430 = vmatmul.mubr.f32.gmra.mrb[0].mxu0 %v363
    %v431 = vpop.f32.mrb[0].mxu0
    %v432 = vadd.f32 0.0, %v431
    %v433 = vpop.f32.mrb[0].mxu0
    %434 = vdwg.mxu0
    %v435 = vmul.f32 %v432, %v79
    %v436 = vround.ne.pseudo %v435
    %vm437 = vcmask 64512
    %438 = vst.msk [vmem:[#allocation9] sm:$0xff] %vm437, %v436
    %439 = vmatprep.subr.mxu0 0.0
    %440 = vmatpush1.msra.mxu0 %v118
    %441 = vmatprep.subr.mxu0 0.0
    %442 = vmatpush1.msra.mxu0 %v119
    %443 = vmatprep.subr.mxu0 0.0
    %444 = vmatpush1.msra.mxu0 0.0
    %445 = vmatprep.subr.mxu0 0.0
    %446 = vmatpush1.msra.mxu0 0.0
    %447 = vmatprep.subr.mxu0 0.0
    %448 = vmatpush1.msra.mxu0 0.0
    %449 = vmatprep.subr.mxu0 0.0
    %450 = vmatpush1.msra.mxu0 0.0
    %451 = vmatprep.subr.mxu0 0.0
    %452 = vmatpush1.msra.mxu0 0.0
    %453 = vmatprep.subr.mxu0 0.0
    %454 = vmatpush1.msra.mxu0 0.0
    %455 = vmatprep.subr.mxu0 0.0
    %456 = vmatpush1.msra.mxu0 0.0
    %457 = vmatprep.subr.mxu0 0.0
    %458 = vmatpush1.msra.mxu0 0.0
    %459 = vmatprep.subr.mxu0 0.0
    %460 = vmatpush1.msra.mxu0 0.0
    %461 = vmatprep.subr.mxu0 0.0
    %462 = vmatpush1.msra.mxu0 0.0
    %463 = vmatprep.subr.mxu0 0.0
    %464 = vmatpush1.msra.mxu0 0.0
    %465 = vmatprep.subr.mxu0 0.0
    %466 = vmatpush1.msra.mxu0 0.0
    %467 = vmatprep.subr.mxu0 0.0
    %468 = vmatpush1.msra.mxu0 0.0
    %469 = vmatprep.subr.mxu0 0.0
    %470 = vmatpush1.msra.mxu0 0.0
    %471 = vmatprep.subr.mxu0 0.0
    %472 = vmatpush1.msra.mxu0 0.0
    %473 = vmatprep.subr.mxu0 0.0
    %474 = vmatpush1.msra.mxu0 0.0
    %475 = vmatprep.subr.mxu0 0.0
    %476 = vmatpush1.msra.mxu0 0.0
    %477 = vmatprep.subr.mxu0 0.0
    %478 = vmatpush1.msra.mxu0 0.0
    %479 = vmatprep.subr.mxu0 0.0
    %480 = vmatpush1.msra.mxu0 0.0
    %481 = vmatprep.subr.mxu0 0.0
    %482 = vmatpush1.msra.mxu0 0.0
    %483 = vmatprep.subr.mxu0 0.0
    %484 = vmatpush1.msra.mxu0 0.0
    %485 = vmatprep.subr.mxu0 0.0
    %486 = vmatpush1.msra.mxu0 0.0
    %487 = vmatprep.subr.mxu0 0.0
    %488 = vmatpush1.msra.mxu0 0.0
    %489 = vmatprep.subr.mxu0 0.0
    %490 = vmatpush1.msra.mxu0 0.0
    %491 = vmatprep.subr.mxu0 0.0
    %492 = vmatpush1.msra.mxu0 0.0
    %493 = vmatprep.subr.mxu0 0.0
    %494 = vmatpush1.msra.mxu0 0.0
    %495 = vmatprep.subr.mxu0 0.0
    %496 = vmatpush1.msra.mxu0 0.0
    %497 = vmatprep.subr.mxu0 0.0
    %498 = vmatpush1.msra.mxu0 0.0
    %499 = vmatprep.subr.mxu0 0.0
    %500 = vmatpush1.msra.mxu0 0.0
    %501 = vmatprep.subr.mxu0 0.0
    %502 = vmatpush1.msra.mxu0 0.0
    %503 = vmatprep.mubr.f32.mxu0 0.0
    %504 = vmatmul.mubr.f32.gmra.mrb[0].mxu0 %v290
    %v505 = vpop.f32.mrb[0].mxu0
    %v506 = vadd.f32 0.0, %v505
    %v507 = vpop.f32.mrb[0].mxu0
    %508 = vdwg.mxu0
    %v510 = vsel %vm120, %v506, 0
    %512 = vmatprep.subr.mxu0 0.0
    %513 = vmatpush1.msra.mxu0 %v75
    %514 = vmatprep.subr.mxu0 0.0
    %515 = vmatpush1.msra.mxu0 %v76
    %516 = vmatprep.subr.mxu0 0.0
    %517 = vmatpush1.msra.mxu0 0.0
    %518 = vmatprep.subr.mxu0 0.0
    %519 = vmatpush1.msra.mxu0 0.0
    %520 = vmatprep.subr.mxu0 0.0
    %521 = vmatpush1.msra.mxu0 0.0
    %522 = vmatprep.subr.mxu0 0.0
    %523 = vmatpush1.msra.mxu0 0.0
    %524 = vmatprep.subr.mxu0 0.0
    %525 = vmatpush1.msra.mxu0 0.0
    %526 = vmatprep.subr.mxu0 0.0
    %527 = vmatpush1.msra.mxu0 0.0
    %528 = vmatprep.subr.mxu0 0.0
    %529 = vmatpush1.msra.mxu0 0.0
    %530 = vmatprep.subr.mxu0 0.0
    %531 = vmatpush1.msra.mxu0 0.0
    %532 = vmatprep.subr.mxu0 0.0
    %533 = vmatpush1.msra.mxu0 0.0
    %534 = vmatprep.subr.mxu0 0.0
    %535 = vmatpush1.msra.mxu0 0.0
    %536 = vmatprep.subr.mxu0 0.0
    %537 = vmatpush1.msra.mxu0 0.0
    %538 = vmatprep.subr.mxu0 0.0
    %539 = vmatpush1.msra.mxu0 0.0
    %540 = vmatprep.subr.mxu0 0.0
    %541 = vmatpush1.msra.mxu0 0.0
    %542 = vmatprep.subr.mxu0 0.0
    %543 = vmatpush1.msra.mxu0 0.0
    %544 = vmatprep.subr.mxu0 0.0
    %545 = vmatpush1.msra.mxu0 0.0
    %546 = vmatprep.subr.mxu0 0.0
    %547 = vmatpush1.msra.mxu0 0.0
    %548 = vmatprep.subr.mxu0 0.0
    %549 = vmatpush1.msra.mxu0 0.0
    %550 = vmatprep.subr.mxu0 0.0
    %551 = vmatpush1.msra.mxu0 0.0
    %552 = vmatprep.subr.mxu0 0.0
    %553 = vmatpush1.msra.mxu0 0.0
    %554 = vmatprep.subr.mxu0 0.0
    %555 = vmatpush1.msra.mxu0 0.0
    %556 = vmatprep.subr.mxu0 0.0
    %557 = vmatpush1.msra.mxu0 0.0
    %558 = vmatprep.subr.mxu0 0.0
    %559 = vmatpush1.msra.mxu0 0.0
    %560 = vmatprep.subr.mxu0 0.0
    %561 = vmatpush1.msra.mxu0 0.0
    %562 = vmatprep.subr.mxu0 0.0
    %563 = vmatpush1.msra.mxu0 0.0
    %564 = vmatprep.subr.mxu0 0.0
    %565 = vmatpush1.msra.mxu0 0.0
    %566 = vmatprep.subr.mxu0 0.0
    %567 = vmatpush1.msra.mxu0 0.0
    %568 = vmatprep.subr.mxu0 0.0
    %569 = vmatpush1.msra.mxu0 0.0
    %570 = vmatprep.subr.mxu0 0.0
    %571 = vmatpush1.msra.mxu0 0.0
    %572 = vmatprep.subr.mxu0 0.0
    %573 = vmatpush1.msra.mxu0 0.0
    %574 = vmatprep.subr.mxu0 0.0
    %575 = vmatpush1.msra.mxu0 0.0
    %576 = vmatprep.mubr.f32.mxu0 0.0
    %577 = vmatmul.mubr.f32.gmra.mrb[0].mxu0 %v510
    %v578 = vpop.f32.mrb[0].mxu0
    %v579 = vadd.f32 0.0, %v578
    %v580 = vpop.f32.mrb[0].mxu0
    %581 = vdwg.mxu0
    %v582 = vmul.f32 %v579, %v79
    %v583 = vround.ne.pseudo %v582
    %584 = vst.msk [vmem:[#allocation11] sm:$0xff] %vm437, %v583
    %s585 = scalar_lea.vmem [#allocation2], 48
    %v586 = vld [vmem:[%s585] sm:$0xff]
    %v587 = vld [vmem:[%s585 + $0x8] sm:$0xff]
    %s588 = scalar_lea.vmem [#allocation2], 64
    %v589 = vld [vmem:[%s588] sm:$0xff]
    %v590 = vld [vmem:[%s588 + $0x8] sm:$0xff]
    %s591 = scalar_lea.vmem [#allocation2], 80
    %v592 = vld [vmem:[%s591] sm:$0xff]
    %v593 = vld [vmem:[%s591 + $0x8] sm:$0xff]
    %v594 = vmul.f32 %v586, 76.245
    %v595 = vmul.f32 %v587, 76.245
    %v596 = vmul.f32 %v589, 149.685
    %v597 = vmul.f32 %v590, 149.685
    %v598 = vadd.f32 %v594, %v596
    %v599 = vadd.f32 %v595, %v597
    %v600 = vmul.f32 %v592, 29.07
    %v601 = vmul.f32 %v593, 29.07
    %v602 = vadd.f32 %v598, %v600
    %v603 = vadd.f32 %v599, %v601
    %v604 = vsub.f32 %v602, 128.0
    %v605 = vsub.f32 %v603, 128.0
    %v606 = vmul.f32 %v586, -43.02768
    %v607 = vmul.f32 %v587, -43.02768
    %v608 = vmul.f32 %v589, -84.47232
    %v609 = vmul.f32 %v590, -84.47232
    %v610 = vadd.f32 %v606, %v608
    %v611 = vadd.f32 %v607, %v609
    %v612 = vmul.f32 %v592, 127.5
    %v613 = vmul.f32 %v593, 127.5
    %v614 = vadd.f32 %v610, %v612
    %v615 = vadd.f32 %v611, %v613
    %v616 = vmul.f32 %v586, 127.5
    %v617 = vmul.f32 %v587, 127.5
    %v618 = vmul.f32 %v589, -106.76544
    %v619 = vmul.f32 %v590, -106.76544
    %v620 = vadd.f32 %v616, %v618
    %v621 = vadd.f32 %v617, %v619
    %v622 = vmul.f32 %v592, -20.73456
    %v623 = vmul.f32 %v593, -20.73456
    %v624 = vadd.f32 %v620, %v622
    %v625 = vadd.f32 %v621, %v623
    %626 = vmatprep.subr.mxu0 0.0
    %627 = vmatpush1.msra.mxu0 %v604
    %628 = vmatprep.subr.mxu0 0.0
    %629 = vmatpush1.msra.mxu0 %v605
    %630 = vmatprep.subr.mxu0 0.0
    %631 = vmatpush1.msra.mxu0 0.0
    %632 = vmatprep.subr.mxu0 0.0
    %633 = vmatpush1.msra.mxu0 0.0
    %634 = vmatprep.subr.mxu0 0.0
    %635 = vmatpush1.msra.mxu0 0.0
    %636 = vmatprep.subr.mxu0 0.0
    %637 = vmatpush1.msra.mxu0 0.0
    %638 = vmatprep.subr.mxu0 0.0
    %639 = vmatpush1.msra.mxu0 0.0
    %640 = vmatprep.subr.mxu0 0.0
    %641 = vmatpush1.msra.mxu0 0.0
    %642 = vmatprep.subr.mxu0 0.0
    %643 = vmatpush1.msra.mxu0 0.0
    %644 = vmatprep.subr.mxu0 0.0
    %645 = vmatpush1.msra.mxu0 0.0
    %646 = vmatprep.subr.mxu0 0.0
    %647 = vmatpush1.msra.mxu0 0.0
    %648 = vmatprep.subr.mxu0 0.0
    %649 = vmatpush1.msra.mxu0 0.0
    %650 = vmatprep.subr.mxu0 0.0
    %651 = vmatpush1.msra.mxu0 0.0
    %652 = vmatprep.subr.mxu0 0.0
    %653 = vmatpush1.msra.mxu0 0.0
    %654 = vmatprep.subr.mxu0 0.0
    %655 = vmatpush1.msra.mxu0 0.0
    %656 = vmatprep.subr.mxu0 0.0
    %657 = vmatpush1.msra.mxu0 0.0
    %658 = vmatprep.subr.mxu0 0.0
    %659 = vmatpush1.msra.mxu0 0.0
    %660 = vmatprep.subr.mxu0 0.0
    %661 = vmatpush1.msra.mxu0 0.0
    %662 = vmatprep.subr.mxu0 0.0
    %663 = vmatpush1.msra.mxu0 0.0
    %664 = vmatprep.subr.mxu0 0.0
    %665 = vmatpush1.msra.mxu0 0.0
    %666 = vmatprep.subr.mxu0 0.0
    %667 = vmatpush1.msra.mxu0 0.0
    %668 = vmatprep.subr.mxu0 0.0
    %669 = vmatpush1.msra.mxu0 0.0
    %670 = vmatprep.subr.mxu0 0.0
    %671 = vmatpush1.msra.mxu0 0.0
    %672 = vmatprep.subr.mxu0 0.0
    %673 = vmatpush1.msra.mxu0 0.0
    %674 = vmatprep.subr.mxu0 0.0
    %675 = vmatpush1.msra.mxu0 0.0
    %676 = vmatprep.subr.mxu0 0.0
    %677 = vmatpush1.msra.mxu0 0.0
    %678 = vmatprep.subr.mxu0 0.0
    %679 = vmatpush1.msra.mxu0 0.0
    %680 = vmatprep.subr.mxu0 0.0
    %681 = vmatpush1.msra.mxu0 0.0
    %682 = vmatprep.subr.mxu0 0.0
    %683 = vmatpush1.msra.mxu0 0.0
    %684 = vmatprep.subr.mxu0 0.0
    %685 = vmatpush1.msra.mxu0 0.0
    %686 = vmatprep.subr.mxu0 0.0
    %687 = vmatpush1.msra.mxu0 0.0
    %688 = vmatprep.subr.mxu0 0.0
    %689 = vmatpush1.msra.mxu0 0.0
    %690 = vmatprep.mubr.f32.mxu0 0.0
    %691 = vmatmul.mubr.f32.gmra.mrb[0].mxu0 %v122
    %v692 = vpop.f32.mrb[0].mxu0
    %v693 = vadd.f32 0.0, %v692
    %v694 = vpop.f32.mrb[0].mxu0
    %695 = vmatprep.mubr.f32.mxu0 0.0
    %696 = vmatmul.mubr.f32.gmra.mrb[0].mxu0 %v125
    %v697 = vpop.f32.mrb[0].mxu0
    %v698 = vadd.f32 0.0, %v697
    %v699 = vpop.f32.mrb[0].mxu0
    %700 = vdwg.mxu0
    %v702 = vsel %vm120, %v693, 0
    %v705 = vsel %vm120, %v698, 0
    %707 = vmatprep.subr.mxu0 0.0
    %708 = vmatpush1.msra.mxu0 %v72
    %709 = vmatprep.subr.mxu0 0.0
    %710 = vmatpush1.msra.mxu0 %v73
    %711 = vmatprep.subr.mxu0 0.0
    %712 = vmatpush1.msra.mxu0 0.0
    %713 = vmatprep.subr.mxu0 0.0
    %714 = vmatpush1.msra.mxu0 0.0
    %715 = vmatprep.subr.mxu0 0.0
    %716 = vmatpush1.msra.mxu0 0.0
    %717 = vmatprep.subr.mxu0 0.0
    %718 = vmatpush1.msra.mxu0 0.0
    %719 = vmatprep.subr.mxu0 0.0
    %720 = vmatpush1.msra.mxu0 0.0
    %721 = vmatprep.subr.mxu0 0.0
    %722 = vmatpush1.msra.mxu0 0.0
    %723 = vmatprep.subr.mxu0 0.0
    %724 = vmatpush1.msra.mxu0 0.0
    %725 = vmatprep.subr.mxu0 0.0
    %726 = vmatpush1.msra.mxu0 0.0
    %727 = vmatprep.subr.mxu0 0.0
    %728 = vmatpush1.msra.mxu0 0.0
    %729 = vmatprep.subr.mxu0 0.0
    %730 = vmatpush1.msra.mxu0 0.0
    %731 = vmatprep.subr.mxu0 0.0
    %732 = vmatpush1.msra.mxu0 0.0
    %733 = vmatprep.subr.mxu0 0.0
    %734 = vmatpush1.msra.mxu0 0.0
    %735 = vmatprep.subr.mxu0 0.0
    %736 = vmatpush1.msra.mxu0 0.0
    %737 = vmatprep.subr.mxu0 0.0
    %738 = vmatpush1.msra.mxu0 0.0
    %739 = vmatprep.subr.mxu0 0.0
    %740 = vmatpush1.msra.mxu0 0.0
    %741 = vmatprep.subr.mxu0 0.0
    %742 = vmatpush1.msra.mxu0 0.0
    %743 = vmatprep.subr.mxu0 0.0
    %744 = vmatpush1.msra.mxu0 0.0
    %745 = vmatprep.subr.mxu0 0.0
    %746 = vmatpush1.msra.mxu0 0.0
    %747 = vmatprep.subr.mxu0 0.0
    %748 = vmatpush1.msra.mxu0 0.0
    %749 = vmatprep.subr.mxu0 0.0
    %750 = vmatpush1.msra.mxu0 0.0
    %751 = vmatprep.subr.mxu0 0.0
    %752 = vmatpush1.msra.mxu0 0.0
    %753 = vmatprep.subr.mxu0 0.0
    %754 = vmatpush1.msra.mxu0 0.0
    %755 = vmatprep.subr.mxu0 0.0
    %756 = vmatpush1.msra.mxu0 0.0
    %757 = vmatprep.subr.mxu0 0.0
    %758 = vmatpush1.msra.mxu0 0.0
    %759 = vmatprep.subr.mxu0 0.0
    %760 = vmatpush1.msra.mxu0 0.0
    %761 = vmatprep.subr.mxu0 0.0
    %762 = vmatpush1.msra.mxu0 0.0
    %763 = vmatprep.subr.mxu0 0.0
    %764 = vmatpush1.msra.mxu0 0.0
    %765 = vmatprep.subr.mxu0 0.0
    %766 = vmatpush1.msra.mxu0 0.0
    %767 = vmatprep.subr.mxu0 0.0
    %768 = vmatpush1.msra.mxu0 0.0
    %769 = vmatprep.subr.mxu0 0.0
    %770 = vmatpush1.msra.mxu0 0.0
    %771 = vmatprep.mubr.f32.mxu0 0.0
    %772 = vmatmul.mubr.f32.gmra.mrb[0].mxu0 %v702
    %v773 = vpop.f32.mrb[0].mxu0
    %v774 = vadd.f32 0.0, %v773
    %v775 = vpop.f32.mrb[0].mxu0
    %776 = vmatprep.mubr.f32.mxu0 0.0
    %777 = vmatmul.mubr.f32.gmra.mrb[0].mxu0 %v705
    %v778 = vpop.f32.mrb[0].mxu0
    %v779 = vadd.f32 0.0, %v778
    %v780 = vpop.f32.mrb[0].mxu0
    %781 = vdwg.mxu0
    %v782 = vmul.f32 %v774, %v77
    %v783 = vmul.f32 %v779, %v78
    %v784 = vround.ne.pseudo %v782
    %v785 = vround.ne.pseudo %v783
    %s786 = scalar_lea.vmem [#allocation8], 16
    %787 = vst.msk [vmem:[%s786] sm:$0xff] %vm120, %v784
    %788 = vst.msk [vmem:[%s786 + $0x8] sm:$0xff] %vm120, %v785
    %789 = vmatprep.subr.mxu0 0.0
    %790 = vmatpush1.msra.mxu0 %v614
    %791 = vmatprep.subr.mxu0 0.0
    %792 = vmatpush1.msra.mxu0 %v615
    %793 = vmatprep.subr.mxu0 0.0
    %794 = vmatpush1.msra.mxu0 0.0
    %795 = vmatprep.subr.mxu0 0.0
    %796 = vmatpush1.msra.mxu0 0.0
    %797 = vmatprep.subr.mxu0 0.0
    %798 = vmatpush1.msra.mxu0 0.0
    %799 = vmatprep.subr.mxu0 0.0
    %800 = vmatpush1.msra.mxu0 0.0
    %801 = vmatprep.subr.mxu0 0.0
    %802 = vmatpush1.msra.mxu0 0.0
    %803 = vmatprep.subr.mxu0 0.0
    %804 = vmatpush1.msra.mxu0 0.0
    %805 = vmatprep.subr.mxu0 0.0
    %806 = vmatpush1.msra.mxu0 0.0
    %807 = vmatprep.subr.mxu0 0.0
    %808 = vmatpush1.msra.mxu0 0.0
    %809 = vmatprep.subr.mxu0 0.0
    %810 = vmatpush1.msra.mxu0 0.0
    %811 = vmatprep.subr.mxu0 0.0
    %812 = vmatpush1.msra.mxu0 0.0
    %813 = vmatprep.subr.mxu0 0.0
    %814 = vmatpush1.msra.mxu0 0.0
    %815 = vmatprep.subr.mxu0 0.0
    %816 = vmatpush1.msra.mxu0 0.0
    %817 = vmatprep.subr.mxu0 0.0
    %818 = vmatpush1.msra.mxu0 0.0
    %819 = vmatprep.subr.mxu0 0.0
    %820 = vmatpush1.msra.mxu0 0.0
    %821 = vmatprep.subr.mxu0 0.0
    %822 = vmatpush1.msra.mxu0 0.0
    %823 = vmatprep.subr.mxu0 0.0
    %824 = vmatpush1.msra.mxu0 0.0
    %825 = vmatprep.subr.mxu0 0.0
    %826 = vmatpush1.msra.mxu0 0.0
    %827 = vmatprep.subr.mxu0 0.0
    %828 = vmatpush1.msra.mxu0 0.0
    %829 = vmatprep.subr.mxu0 0.0
    %830 = vmatpush1.msra.mxu0 0.0
    %831 = vmatprep.subr.mxu0 0.0
    %832 = vmatpush1.msra.mxu0 0.0
    %833 = vmatprep.subr.mxu0 0.0
    %834 = vmatpush1.msra.mxu0 0.0
    %835 = vmatprep.subr.mxu0 0.0
    %836 = vmatpush1.msra.mxu0 0.0
    %837 = vmatprep.subr.mxu0 0.0
    %838 = vmatpush1.msra.mxu0 0.0
    %839 = vmatprep.subr.mxu0 0.0
    %840 = vmatpush1.msra.mxu0 0.0
    %841 = vmatprep.subr.mxu0 0.0
    %842 = vmatpush1.msra.mxu0 0.0
    %843 = vmatprep.subr.mxu0 0.0
    %844 = vmatpush1.msra.mxu0 0.0
    %845 = vmatprep.subr.mxu0 0.0
    %846 = vmatpush1.msra.mxu0 0.0
    %847 = vmatprep.subr.mxu0 0.0
    %848 = vmatpush1.msra.mxu0 0.0
    %849 = vmatprep.subr.mxu0 0.0
    %850 = vmatpush1.msra.mxu0 0.0
    %851 = vmatprep.subr.mxu0 0.0
    %852 = vmatpush1.msra.mxu0 0.0
    %853 = vmatprep.mubr.f32.mxu0 0.0
    %854 = vmatmul.mubr.f32.gmra.mrb[0].mxu0 %v290
    %v855 = vpop.f32.mrb[0].mxu0
    %v856 = vadd.f32 0.0, %v855
    %v857 = vpop.f32.mrb[0].mxu0
    %858 = vdwg.mxu0
    %v860 = vsel %vm120, %v856, 0
    %862 = vmatprep.subr.mxu0 0.0
    %863 = vmatpush1.msra.mxu0 %v75
    %864 = vmatprep.subr.mxu0 0.0
    %865 = vmatpush1.msra.mxu0 %v76
    %866 = vmatprep.subr.mxu0 0.0
    %867 = vmatpush1.msra.mxu0 0.0
    %868 = vmatprep.subr.mxu0 0.0
    %869 = vmatpush1.msra.mxu0 0.0
    %870 = vmatprep.subr.mxu0 0.0
    %871 = vmatpush1.msra.mxu0 0.0
    %872 = vmatprep.subr.mxu0 0.0
    %873 = vmatpush1.msra.mxu0 0.0
    %874 = vmatprep.subr.mxu0 0.0
    %875 = vmatpush1.msra.mxu0 0.0
    %876 = vmatprep.subr.mxu0 0.0
    %877 = vmatpush1.msra.mxu0 0.0
    %878 = vmatprep.subr.mxu0 0.0
    %879 = vmatpush1.msra.mxu0 0.0
    %880 = vmatprep.subr.mxu0 0.0
    %881 = vmatpush1.msra.mxu0 0.0
    %882 = vmatprep.subr.mxu0 0.0
    %883 = vmatpush1.msra.mxu0 0.0
    %884 = vmatprep.subr.mxu0 0.0
    %885 = vmatpush1.msra.mxu0 0.0
    %886 = vmatprep.subr.mxu0 0.0
    %887 = vmatpush1.msra.mxu0 0.0
    %888 = vmatprep.subr.mxu0 0.0
    %889 = vmatpush1.msra.mxu0 0.0
    %890 = vmatprep.subr.mxu0 0.0
    %891 = vmatpush1.msra.mxu0 0.0
    %892 = vmatprep.subr.mxu0 0.0
    %893 = vmatpush1.msra.mxu0 0.0
    %894 = vmatprep.subr.mxu0 0.0
    %895 = vmatpush1.msra.mxu0 0.0
    %896 = vmatprep.subr.mxu0 0.0
    %897 = vmatpush1.msra.mxu0 0.0
    %898 = vmatprep.subr.mxu0 0.0
    %899 = vmatpush1.msra.mxu0 0.0
    %900 = vmatprep.subr.mxu0 0.0
    %901 = vmatpush1.msra.mxu0 0.0
    %902 = vmatprep.subr.mxu0 0.0
    %903 = vmatpush1.msra.mxu0 0.0
    %904 = vmatprep.subr.mxu0 0.0
    %905 = vmatpush1.msra.mxu0 0.0
    %906 = vmatprep.subr.mxu0 0.0
    %907 = vmatpush1.msra.mxu0 0.0
    %908 = vmatprep.subr.mxu0 0.0
    %909 = vmatpush1.msra.mxu0 0.0
    %910 = vmatprep.subr.mxu0 0.0
    %911 = vmatpush1.msra.mxu0 0.0
    %912 = vmatprep.subr.mxu0 0.0
    %913 = vmatpush1.msra.mxu0 0.0
    %914 = vmatprep.subr.mxu0 0.0
    %915 = vmatpush1.msra.mxu0 0.0
    %916 = vmatprep.subr.mxu0 0.0
    %917 = vmatpush1.msra.mxu0 0.0
    %918 = vmatprep.subr.mxu0 0.0
    %919 = vmatpush1.msra.mxu0 0.0
    %920 = vmatprep.subr.mxu0 0.0
    %921 = vmatpush1.msra.mxu0 0.0
    %922 = vmatprep.subr.mxu0 0.0
    %923 = vmatpush1.msra.mxu0 0.0
    %924 = vmatprep.subr.mxu0 0.0
    %925 = vmatpush1.msra.mxu0 0.0
    %926 = vmatprep.mubr.f32.mxu0 0.0
    %927 = vmatmul.mubr.f32.gmra.mrb[0].mxu0 %v860
    %v928 = vpop.f32.mrb[0].mxu0
    %v929 = vadd.f32 0.0, %v928
    %v930 = vpop.f32.mrb[0].mxu0
    %931 = vdwg.mxu0
    %v932 = vmul.f32 %v929, %v79
    %v933 = vround.ne.pseudo %v932
    %s934 = scalar_lea.vmem [#allocation9], 8
    %935 = vst.msk [vmem:[%s934] sm:$0xff] %vm437, %v933
    %936 = vmatprep.subr.mxu0 0.0
    %937 = vmatpush1.msra.mxu0 %v624
    %938 = vmatprep.subr.mxu0 0.0
    %939 = vmatpush1.msra.mxu0 %v625
    %940 = vmatprep.subr.mxu0 0.0
    %941 = vmatpush1.msra.mxu0 0.0
    %942 = vmatprep.subr.mxu0 0.0
    %943 = vmatpush1.msra.mxu0 0.0
    %944 = vmatprep.subr.mxu0 0.0
    %945 = vmatpush1.msra.mxu0 0.0
    %946 = vmatprep.subr.mxu0 0.0
    %947 = vmatpush1.msra.mxu0 0.0
    %948 = vmatprep.subr.mxu0 0.0
    %949 = vmatpush1.msra.mxu0 0.0
    %950 = vmatprep.subr.mxu0 0.0
    %951 = vmatpush1.msra.mxu0 0.0
    %952 = vmatprep.subr.mxu0 0.0
    %953 = vmatpush1.msra.mxu0 0.0
    %954 = vmatprep.subr.mxu0 0.0
    %955 = vmatpush1.msra.mxu0 0.0
    %956 = vmatprep.subr.mxu0 0.0
    %957 = vmatpush1.msra.mxu0 0.0
    %958 = vmatprep.subr.mxu0 0.0
    %959 = vmatpush1.msra.mxu0 0.0
    %960 = vmatprep.subr.mxu0 0.0
    %961 = vmatpush1.msra.mxu0 0.0
    %962 = vmatprep.subr.mxu0 0.0
    %963 = vmatpush1.msra.mxu0 0.0
    %964 = vmatprep.subr.mxu0 0.0
    %965 = vmatpush1.msra.mxu0 0.0
    %966 = vmatprep.subr.mxu0 0.0
    %967 = vmatpush1.msra.mxu0 0.0
    %968 = vmatprep.subr.mxu0 0.0
    %969 = vmatpush1.msra.mxu0 0.0
    %970 = vmatprep.subr.mxu0 0.0
    %971 = vmatpush1.msra.mxu0 0.0
    %972 = vmatprep.subr.mxu0 0.0
    %973 = vmatpush1.msra.mxu0 0.0
    %974 = vmatprep.subr.mxu0 0.0
    %975 = vmatpush1.msra.mxu0 0.0
    %976 = vmatprep.subr.mxu0 0.0
    %977 = vmatpush1.msra.mxu0 0.0
    %978 = vmatprep.subr.mxu0 0.0
    %979 = vmatpush1.msra.mxu0 0.0
    %980 = vmatprep.subr.mxu0 0.0
    %981 = vmatpush1.msra.mxu0 0.0
    %982 = vmatprep.subr.mxu0 0.0
    %983 = vmatpush1.msra.mxu0 0.0
    %984 = vmatprep.subr.mxu0 0.0
    %985 = vmatpush1.msra.mxu0 0.0
    %986 = vmatprep.subr.mxu0 0.0
    %987 = vmatpush1.msra.mxu0 0.0
    %988 = vmatprep.subr.mxu0 0.0
    %989 = vmatpush1.msra.mxu0 0.0
    %990 = vmatprep.subr.mxu0 0.0
    %991 = vmatpush1.msra.mxu0 0.0
    %992 = vmatprep.subr.mxu0 0.0
    %993 = vmatpush1.msra.mxu0 0.0
    %994 = vmatprep.subr.mxu0 0.0
    %995 = vmatpush1.msra.mxu0 0.0
    %996 = vmatprep.subr.mxu0 0.0
    %997 = vmatpush1.msra.mxu0 0.0
    %998 = vmatprep.subr.mxu0 0.0
    %999 = vmatpush1.msra.mxu0 0.0
    %1000 = vmatprep.mubr.f32.mxu0 0.0
    %1001 = vmatmul.mubr.f32.gmra.mrb[0].mxu0 %v290
    %v1002 = vpop.f32.mrb[0].mxu0
    %v1003 = vadd.f32 0.0, %v1002
    %v1004 = vpop.f32.mrb[0].mxu0
    %1005 = vdwg.mxu0
    %v1007 = vsel %vm120, %v1003, 0
    %1009 = vmatprep.subr.mxu0 0.0
    %1010 = vmatpush1.msra.mxu0 %v75
    %1011 = vmatprep.subr.mxu0 0.0
    %1012 = vmatpush1.msra.mxu0 %v76
    %1013 = vmatprep.subr.mxu0 0.0
    %1014 = vmatpush1.msra.mxu0 0.0
    %1015 = vmatprep.subr.mxu0 0.0
    %1016 = vmatpush1.msra.mxu0 0.0
    %1017 = vmatprep.subr.mxu0 0.0
    %1018 = vmatpush1.msra.mxu0 0.0
    %1019 = vmatprep.subr.mxu0 0.0
    %1020 = vmatpush1.msra.mxu0 0.0
    %1021 = vmatprep.subr.mxu0 0.0
    %1022 = vmatpush1.msra.mxu0 0.0
    %1023 = vmatprep.subr.mxu0 0.0
    %1024 = vmatpush1.msra.mxu0 0.0
    %1025 = vmatprep.subr.mxu0 0.0
    %1026 = vmatpush1.msra.mxu0 0.0
    %1027 = vmatprep.subr.mxu0 0.0
    %1028 = vmatpush1.msra.mxu0 0.0
    %1029 = vmatprep.subr.mxu0 0.0
    %1030 = vmatpush1.msra.mxu0 0.0
    %1031 = vmatprep.subr.mxu0 0.0
    %1032 = vmatpush1.msra.mxu0 0.0
    %1033 = vmatprep.subr.mxu0 0.0
    %1034 = vmatpush1.msra.mxu0 0.0
    %1035 = vmatprep.subr.mxu0 0.0
    %1036 = vmatpush1.msra.mxu0 0.0
    %1037 = vmatprep.subr.mxu0 0.0
    %1038 = vmatpush1.msra.mxu0 0.0
    %1039 = vmatprep.subr.mxu0 0.0
    %1040 = vmatpush1.msra.mxu0 0.0
    %1041 = vmatprep.subr.mxu0 0.0
    %1042 = vmatpush1.msra.mxu0 0.0
    %1043 = vmatprep.subr.mxu0 0.0
    %1044 = vmatpush1.msra.mxu0 0.0
    %1045 = vmatprep.subr.mxu0 0.0
    %1046 = vmatpush1.msra.mxu0 0.0
    %1047 = vmatprep.subr.mxu0 0.0
    %1048 = vmatpush1.msra.mxu0 0.0
    %1049 = vmatprep.subr.mxu0 0.0
    %1050 = vmatpush1.msra.mxu0 0.0
    %1051 = vmatprep.subr.mxu0 0.0
    %1052 = vmatpush1.msra.mxu0 0.0
    %1053 = vmatprep.subr.mxu0 0.0
    %1054 = vmatpush1.msra.mxu0 0.0
    %1055 = vmatprep.subr.mxu0 0.0
    %1056 = vmatpush1.msra.mxu0 0.0
    %1057 = vmatprep.subr.mxu0 0.0
    %1058 = vmatpush1.msra.mxu0 0.0
    %1059 = vmatprep.subr.mxu0 0.0
    %1060 = vmatpush1.msra.mxu0 0.0
    %1061 = vmatprep.subr.mxu0 0.0
    %1062 = vmatpush1.msra.mxu0 0.0
    %1063 = vmatprep.subr.mxu0 0.0
    %1064 = vmatpush1.msra.mxu0 0.0
    %1065 = vmatprep.subr.mxu0 0.0
    %1066 = vmatpush1.msra.mxu0 0.0
    %1067 = vmatprep.subr.mxu0 0.0
    %1068 = vmatpush1.msra.mxu0 0.0
    %1069 = vmatprep.subr.mxu0 0.0
    %1070 = vmatpush1.msra.mxu0 0.0
    %1071 = vmatprep.subr.mxu0 0.0
    %1072 = vmatpush1.msra.mxu0 0.0
    %1073 = vmatprep.mubr.f32.mxu0 0.0
    %1074 = vmatmul.mubr.f32.gmra.mrb[0].mxu0 %v1007
    %v1075 = vpop.f32.mrb[0].mxu0
    %v1076 = vadd.f32 0.0, %v1075
    %v1077 = vpop.f32.mrb[0].mxu0
    %1078 = vdwg.mxu0
    %v1079 = vmul.f32 %v1076, %v79
    %v1080 = vround.ne.pseudo %v1079
    %s1081 = scalar_lea.vmem [#allocation11], 8
    %1082 = vst.msk [vmem:[%s1081] sm:$0xff] %vm437, %v1080
    // Predicated region
    $region42: #{tpu_custom_call.1} parent=1 // pred_check
      _
    $region43: #{tpu_custom_call.1} parent=1 // pred_check_branch
      %1084 = sbr.rel (0) target = $region45
    $region44: #{tpu_custom_call.1} parent=1 // pred_region
      %s1086 = ssub.s32 512, 512
      %1087 = vsyncadd [#allocation4], %s1086
      %s1088 = sshll.u32 [#allocation8], 4
      %s1089 = int_to_ptr.vmem [resolvable:$true] %s1088
      %1094 = dma.vmem_to_hbm [thread:$0]  %s1089, 512, %s7, [#allocation4], 128, 128, 8
    $region45: #{tpu_custom_call.1} parent=1 // pred_fallthru
      _
    // Predicated region
    $region46: #{tpu_custom_call.1} parent=1 // pred_check
      _
    $region47: #{tpu_custom_call.1} parent=1 // pred_check_branch
      %1096 = sbr.rel (0) target = $region49
    $region48: #{tpu_custom_call.1} parent=1 // pred_region
      %s1098 = ssub.s32 256, 256
      %1099 = vsyncadd [#allocation10], %s1098
      %s1100 = sshll.u32 [#allocation9], 4
      %s1101 = int_to_ptr.vmem [resolvable:$true] %s1100
      %1106 = dma.vmem_to_hbm [thread:$0]  %s1101, 256, %s8, [#allocation10], 128, 128, 8
    $region49: #{tpu_custom_call.1} parent=1 // pred_fallthru
      _
    // Predicated region
    $region50: #{tpu_custom_call.1} parent=1 // pred_check
      _
    $region51: #{tpu_custom_call.1} parent=1 // pred_check_branch
      %1108 = sbr.rel (0) target = $region53
    $region52: #{tpu_custom_call.1} parent=1 // pred_region
      %s1110 = ssub.s32 256, 256
      %1111 = vsyncadd [#allocation10], %s1110
      %s1112 = sshll.u32 [#allocation11], 4
      %s1113 = int_to_ptr.vmem [resolvable:$true] %s1112
      %1118 = dma.vmem_to_hbm [thread:$0]  %s1113, 256, %s9, [#allocation10], 128, 128, 8
    $region53: #{tpu_custom_call.1} parent=1 // pred_fallthru
      _
    // Predicated region
    $region54: #{tpu_custom_call.1} parent=1 // pred_check
      _
    $region55: #{tpu_custom_call.1} parent=1 // pred_check_branch
      %1120 = sbr.rel (0) target = $region57
    $region56: #{tpu_custom_call.1} parent=1 // pred_region
      %1121 = dma.done [#allocation4], 512
    $region57: #{tpu_custom_call.1} parent=1 // pred_fallthru
      _
    // Predicated region
    $region58: #{tpu_custom_call.1} parent=1 // pred_check
      _
    $region59: #{tpu_custom_call.1} parent=1 // pred_check_branch
      %1123 = sbr.rel (0) target = $region61
    $region60: #{tpu_custom_call.1} parent=1 // pred_region
      %1124 = dma.done [#allocation10], 256
    $region61: #{tpu_custom_call.1} parent=1 // pred_fallthru
      _
    // Predicated region
    $region62: #{tpu_custom_call.1} parent=1 // pred_check
      _
    $region63: #{tpu_custom_call.1} parent=1 // pred_check_branch
      %1126 = sbr.rel (0) target = $region65
    $region64: #{tpu_custom_call.1} parent=1 // pred_region
      %1127 = dma.done [#allocation10], 256
    $region65: #{tpu_custom_call.1} parent=1 // pred_fallthru
      _
    %1128 = vsyncpa [#allocation3], 1
    %1129 = vsyncpa [#allocation6], 1
    %1130 = vsyncpa [#allocation4], 1
    %1131 = vsyncpa [#allocation10], 1

</llo_original>
